<compile_context>
chip_gen: v7x
topology: tpu7x:2x2x1
jax: 0.10.0
libtpu: 0.0.40
codegen_flags: <defaults>
</compile_context>

<pallas_src>
import math
import functools
import numpy as np

import jax
import jax.numpy as jnp
from jax.experimental import pallas as pl
from jax.experimental.pallas import tpu as pltpu

# ----------------------------- config (RetinaLoss defaults) -----------------------------
AREAS = [[32, 32], [64, 64], [128, 128], [256, 256], [512, 512]]
RATIOS = [0.5, 1, 2]
SCALES = [2 ** 0, 2 ** (1.0 / 3.0), 2 ** (2.0 / 3.0)]
STRIDES = [8, 16, 32, 64, 128]
ALPHA = 0.25
GAMMA = 2          # integer power -> lowered to multiplies (no float pow)
BETA = 1.0 / 9.0
CLS_LOSS_WEIGHT = 1.0
BOX_LOSS_WEIGHT = 1.0
# TODO(synk): only the default box_loss_type='SmoothL1' is implemented; the IoU/GIoU/DIoU/
# CIoU/EIoU box-loss variants are not translated.

MAX_TILE_N = 4096  # anchors per block (lane axis); capped so C=80 still fits v5e scoped VMEM
M_CHUNK = 8        # GT rows processed per online-argmax step in the assignment kernel
NPAR = 2           # leading parallel axis of the loss grid (v7x megacore split)


def _round_up(x, m):
    return ((x + m - 1) // m) * m


# ----------------------------- RetinaAnchors (deterministic, numpy glue) -----------------------------
def _generate_base_anchors(area, scales, ratios):
    aspects = np.array(
        [[[s * math.sqrt(r), s * math.sqrt(1.0 / r)] for s in scales] for r in ratios],
        dtype=np.float32).reshape(-1, 2)
    base_anchors = np.zeros((len(scales) * len(ratios), 4), dtype=np.float32)
    base_w_h = np.array(area, dtype=np.float32) * aspects
    base_anchors[:, 2:] += base_w_h
    base_anchors[:, 0] -= base_anchors[:, 2] / 2
    base_anchors[:, 1] -= base_anchors[:, 3] / 2
    base_anchors[:, 2] /= 2
    base_anchors[:, 3] /= 2
    return base_anchors


def _generate_anchors_on_feature_map(base_anchors, fm_size, stride):
    # fm_size: [W, H] (faithful to the original feature_size = [shape[2], shape[1]])
    shifts_x = (np.arange(0, fm_size[0]) + 0.5) * stride
    shifts_y = (np.arange(0, fm_size[1]) + 0.5) * stride
    shifts = np.array([[[sx, sy] for sy in shifts_y] for sx in shifts_x], dtype=np.float32)
    shifts = np.expand_dims(np.tile(shifts, (1, 1, 2)), axis=2)          # [W,H,1,4]
    base_anchors = base_anchors[None, None, :, :]                        # [1,1,9,4]
    return (base_anchors + shifts).astype(np.float32)                    # [W,H,9,4]


def build_one_image_anchors(feature_sizes):
    per_level = []
    for area, stride, fs in zip(AREAS, STRIDES, feature_sizes):
        base = _generate_base_anchors(area, SCALES, RATIOS)
        per_level.append(_generate_anchors_on_feature_map(base, fs, stride).reshape(-1, 4))
    return np.concatenate(per_level, axis=0)   # [N_real, 4] xyxy


# ----------------------------- Pallas kernel 1: anchor <-> GT assignment -----------------------------
def _assign_kernel(anchors_ref, ann_ref, out_ref, aprep_ref, *,
                   tn, n_real, m_chunk, nchunks):
    # anchors_ref: [1, 4, TN]   ann_ref: [1, M_pad, 5]   out_ref: [1, 5, TN]
    # aprep_ref (VMEM scratch): [8, TN] per-tile anchor-derived rows
    t = pl.program_id(0)

    a = anchors_ref[0]             # [4, TN]
    ax1 = a[0:1, :]
    ay1 = a[1:2, :]
    ax2 = a[2:3, :]
    ay2 = a[3:4, :]

    # Anchor-derived quantities computed once per anchor tile (batch is the inner grid axis),
    # reused for every image in the batch (removes per-image EUP divides).
    @pl.when(pl.program_id(1) == 0)
    def _():
        aw = ax2 - ax1
        ah = ay2 - ay1
        a_area = jnp.maximum(aw, 0.0) * jnp.maximum(ah, 0.0)
        aprep_ref[...] = jnp.concatenate(
            [a_area, ax1 + 0.5 * aw, ay1 + 0.5 * ah, 1.0 / aw, 1.0 / ah,
             jnp.zeros((3, tn), jnp.float32)], axis=0)

    a_area = aprep_ref[0:1, :]     # needed inside the GT chunk loop

    # Online (chunked) argmax over GT rows.
    # carry rows: [best_iou, bx1, by1, bx2, by2, bcls, 0, 0]  -> shape [8, TN]
    def chunk_update(start, best):
        g = ann_ref[0, pl.ds(start, m_chunk), :]        # [MC, 5]
        gx1 = g[:, 0:1]
        gy1 = g[:, 1:2]
        gx2 = g[:, 2:3]
        gy2 = g[:, 3:4]
        gcls = g[:, 4:5]
        gt_valid = gcls >= 0.0                          # [MC, 1]

        ix1 = jnp.maximum(ax1, gx1)
        iy1 = jnp.maximum(ay1, gy1)
        ix2 = jnp.minimum(ax2, gx2)
        iy2 = jnp.minimum(ay2, gy2)
        inter = jnp.maximum(ix2 - ix1, 0.0) * jnp.maximum(iy2 - iy1, 0.0)    # [MC, TN]
        g_area = jnp.maximum(gx2 - gx1, 0.0) * jnp.maximum(gy2 - gy1, 0.0)   # [MC, 1]
        union = jnp.maximum(a_area + g_area - inter, 0.0001)
        # exact divide: borderline 0.4/0.5 IoUs must not flip vs. the reference
        ious = jnp.where(gt_valid, inter / union, -2.0)                      # [MC, TN]

        c_best = jnp.max(ious, axis=0, keepdims=True)                        # [1, TN]
        row_ids = jax.lax.broadcasted_iota(jnp.int32, ious.shape, 0)
        sel = jnp.min(jnp.where(ious == c_best, row_ids, m_chunk),
                      axis=0, keepdims=True)                                 # first max in chunk
        onehot = row_ids == sel                                              # [MC, TN]

        def gather(col):
            return jnp.sum(jnp.where(onehot, col, 0.0), axis=0, keepdims=True)

        c_pack = jnp.concatenate(
            [c_best, gather(gx1), gather(gy1), gather(gx2), gather(gy2),
             gather(gcls), jnp.zeros((2, tn), jnp.float32)], axis=0)         # [8, TN]

        # strict > keeps the earliest GT on cross-chunk ties -> matches reference first-argmax
        return jnp.where(c_best > best[0:1, :], c_pack, best)

    init = jnp.concatenate([jnp.full((1, tn), -2.0, jnp.float32),
                            jnp.zeros((7, tn), jnp.float32)], axis=0)
    if nchunks == 1:
        best = chunk_update(0, init)
    else:
        best = jax.lax.fori_loop(
            0, nchunks, lambda ci, b: chunk_update(ci * m_chunk, b), init,
            unroll=nchunks <= 8)

    best_iou = best[0:1, :]
    bx1 = best[1:2, :]
    by1 = best[2:3, :]
    bx2 = best[3:4, :]
    by2 = best[4:5, :]
    bcls = best[5:6, :]

    # class assignment: -1 ignore, 0 background (<0.4), gt_class+1 positive (>=0.5)
    assigned = jnp.where(best_iou >= 0.5, bcls + 1.0,
                         jnp.where(best_iou < 0.4, 0.0, -1.0))

    # snap assigned gt boxes to (tx, ty, tw, th) using the hoisted anchor quantities
    acx = aprep_ref[1:2, :]
    acy = aprep_ref[2:3, :]
    inv_aw = aprep_ref[3:4, :]
    inv_ah = aprep_ref[4:5, :]
    gw = jnp.maximum(bx2 - bx1, 0.0001)
    gh = jnp.maximum(by2 - by1, 0.0001)
    gcx = bx1 + 0.5 * gw
    gcy = by1 + 0.5 * gh
    tx = (gcx - acx) * inv_aw
    ty = (gcy - acy) * inv_ah
    tw = jnp.log(gw * inv_aw)
    th = jnp.log(gh * inv_ah)

    # padded (fake) anchors never contribute to any loss
    lane = jax.lax.broadcasted_iota(jnp.int32, (1, tn), 1)
    assigned = jnp.where((t * tn + lane) < n_real, assigned, -1.0)

    packed = jnp.concatenate([tx, ty, tw, th, assigned], axis=0)             # [5, TN]
    # image with no valid GT -> whole row is -1 (best_iou stays at -2 for every anchor)
    out_ref[0] = jnp.where(best_iou >= 0.0, packed, -1.0)


def assign_anchors(anchors_t, annotations, n_real, tile_n):
    # anchors_t: [1, 4, N_pad], annotations: [B, M_pad, 5] -> [B, 5, N_pad]
    _, _, n_pad = anchors_t.shape
    b, m_pad, _ = annotations.shape
    n_tiles = n_pad // tile_n
    nchunks = m_pad // M_CHUNK
    kernel = functools.partial(_assign_kernel, tn=tile_n, n_real=n_real,
                               m_chunk=M_CHUNK, nchunks=nchunks)
    return pl.pallas_call(
        kernel,
        out_shape=jax.ShapeDtypeStruct((b, 5, n_pad), jnp.float32),
        grid=(n_tiles, b),   # batch innermost -> anchor tile + derived scratch stay resident
        in_specs=[
            pl.BlockSpec((1, 4, tile_n), lambda ti, bi: (0, 0, ti)),
            pl.BlockSpec((1, m_pad, 5), lambda ti, bi: (bi, 0, 0)),
        ],
        out_specs=pl.BlockSpec((1, 5, tile_n), lambda ti, bi: (bi, 0, ti)),
        scratch_shapes=[pltpu.VMEM((8, tile_n), jnp.float32)],
        compiler_params=pltpu.CompilerParams(
            dimension_semantics=("parallel", "arbitrary")),
    )(anchors_t, annotations)


# ----------------------------- Pallas kernel 2: fused focal + SmoothL1 partial sums -----------------------------
def _loss_kernel(cls_ref, reg_ref, ann_ref, fsum_ref, bsum_ref, pcnt_ref,
                 facc, bacc, pacc):
    # cls_ref: [1, C, TN]  reg_ref: [1, 4, TN]  ann_ref: [1, 5, TN]
    i = pl.program_id(1)

    @pl.when(i == 0)
    def _():
        facc[...] = jnp.zeros_like(facc)
        bacc[...] = jnp.zeros_like(bacc)
        pacc[...] = jnp.zeros_like(pacc)

    ann = ann_ref[0]                                   # [5, TN]
    acls = ann[4:5, :]                                 # [1, TN]
    valid = acls >= 0.0
    pos = acls > 0.0

    # focal loss (class index on the sublane axis, anchors on lanes)
    cls_p = jnp.clip(cls_ref[0], 0.0001, 1.0 - 0.0001)                  # [C, TN]
    class_ids = (jax.lax.broadcasted_iota(jnp.int32, cls_p.shape, 0) + 1
                 ).astype(jnp.float32)
    gt = acls == class_ids                                              # [C, TN]
    pt = jnp.where(gt, cls_p, 1.0 - cls_p)
    alpha_factor = jnp.where(gt, ALPHA, 1.0 - ALPHA)
    one_m_pt = 1.0 - pt
    focal_w = alpha_factor * (one_m_pt * one_m_pt if GAMMA == 2 else one_m_pt ** GAMMA)
    bce = -jnp.log(pt)             # single log: gt is one-hot so BCE == -log(pt)
    # reduce over the class (sublane) axis on the XLU; accumulator is only [1, TN]
    facc[...] += jnp.where(valid, jnp.sum(focal_w * bce, axis=0, keepdims=True), 0.0)

    # SmoothL1 on positive anchors (reduced over the 4 coords per step)
    x = jnp.abs(reg_ref[0] - ann[0:4, :])
    sl1 = jnp.where(x >= BETA, x - 0.5 * BETA, (x * x) * (0.5 / BETA))
    bacc[...] += jnp.where(pos, jnp.sum(sl1, axis=0, keepdims=True), 0.0)
    pacc[...] += jnp.where(pos, 1.0, 0.0)

    # cross-lane reduction only once, in the last inner step
    @pl.when(i == pl.num_programs(1) - 1)
    def _():
        fsum_ref[...] = jnp.sum(facc[...]).reshape(1, 1, 1)
        bsum_ref[...] = jnp.sum(bacc[...]).reshape(1, 1, 1)
        pcnt_ref[...] = jnp.sum(pacc[...]).reshape(1, 1, 1)


def compute_loss_sums(cls_t, reg_t, ann_t, tile_n):
    # cls_t: [B, C, N_pad]  reg_t: [B, 4, N_pad]  ann_t: [B, 5, N_pad]
    b, c, n_pad = cls_t.shape
    n_tiles = n_pad // tile_n
    total = b * n_tiles
    npar = NPAR if total % NPAR == 0 else 1   # wrapper pads n_tiles so this is always NPAR
    inner = total // npar

    def idx(p, i):
        flat = p * inner + i
        return (flat // n_tiles, 0, flat % n_tiles)

    out_sd = jax.ShapeDtypeStruct((npar, 1, 1), jnp.float32)
    out_spec = pl.BlockSpec((1, 1, 1), lambda p, i: (p, 0, 0))
    # Per-step working set at tile_n=4096 and C<=~100 is a few MiB double-buffered -> fits every
    # generation's default scoped-VMEM (including v5e's 16 MiB); no vmem_limit override needed.
    fsum, bsum, pcnt = pl.pallas_call(
        _loss_kernel,
        out_shape=(out_sd, out_sd, out_sd),
        grid=(npar, inner),
        in_specs=[
            pl.BlockSpec((1, c, tile_n), idx),
            pl.BlockSpec((1, 4, tile_n), idx),
            pl.BlockSpec((1, 5, tile_n), idx),
        ],
        out_specs=(out_spec, out_spec, out_spec),
        scratch_shapes=[pltpu.VMEM((1, tile_n), jnp.float32),
                        pltpu.VMEM((1, tile_n), jnp.float32),
                        pltpu.VMEM((1, tile_n), jnp.float32)],
        compiler_params=pltpu.CompilerParams(
            dimension_semantics=("parallel", "arbitrary")),
    )(cls_t, reg_t, ann_t)
    return jnp.sum(fsum), jnp.sum(bsum), jnp.sum(pcnt)


# ----------------------------- RetinaLoss forward (glue + kernels) -----------------------------
def retina_loss(cls_preds, reg_preds, annotations):
    batch_size = annotations.shape[0]
    num_classes = cls_preds[0].shape[-1]

    # anchors (deterministic numpy glue, faithful to RetinaAnchors); single copy, no batch tiling
    feature_sizes = [[int(p.shape[2]), int(p.shape[1])] for p in cls_preds]
    anchors_np = build_one_image_anchors(feature_sizes)          # [N_real, 4]
    n_real = anchors_np.shape[0]

    # tile choice: as large as possible (amortise per-grid-step overhead) but capped at
    # MAX_TILE_N so the loss kernel stays inside v5e's scoped-VMEM default.
    tile_n = min(MAX_TILE_N, _round_up(n_real, 128))
    n_tiles = -(-n_real // tile_n)
    if (batch_size * n_tiles) % NPAR != 0:
        n_tiles += 1   # one extra all-padding tile so the loss grid splits over both v7x TCs
    n_pad = n_tiles * tile_n

    pad_anchor = np.tile(np.array([0.0, 0.0, 8.0, 8.0], np.float32), (n_pad - n_real, 1))
    anchors_pad = np.concatenate([anchors_np, pad_anchor], axis=0)   # [N_pad, 4]
    anchors_t = jnp.asarray(anchors_pad.T[None])                     # [1, 4, N_pad]

    # pad the GT dimension to a multiple of the in-kernel chunk (class -1 rows are inert)
    m = annotations.shape[1]
    m_pad = _round_up(max(m, M_CHUNK), M_CHUNK)
    if m_pad != m:
        annotations = jnp.pad(annotations, ((0, 0), (0, m_pad - m), (0, 0)),
                              constant_values=-1.0)

    # kernel 1: per-anchor (tx,ty,tw,th,cls) targets, anchors-on-lanes, no transpose afterwards
    ann_assigned = assign_anchors(anchors_t, annotations, n_real, tile_n)    # [B, 5, N_pad]

    # lane-dense prediction slabs: natural-layout concat + pad, then one transpose pass.
    # (padded tail columns are inert: their assigned class is -1 so they never contribute)
    # TODO(synk): at production sizes this transpose is still one extra HBM read+write of the
    # class tensor; a natural-layout loss kernel (in-kernel transpose / per-level calls) would
    # remove it.
    cls_nat = jnp.concatenate([p.reshape(batch_size, -1, num_classes) for p in cls_preds],
                              axis=1)                                        # [B, N_real, C]
    reg_nat = jnp.concatenate([p.reshape(batch_size, -1, 4) for p in reg_preds], axis=1)
    pad_n = n_pad - n_real
    if pad_n:
        cls_nat = jnp.pad(cls_nat, ((0, 0), (0, pad_n), (0, 0)))
        reg_nat = jnp.pad(reg_nat, ((0, 0), (0, pad_n), (0, 0)))
    cls_t = jnp.transpose(cls_nat, (0, 2, 1))     # [B, C, N_pad]
    reg_t = jnp.transpose(reg_nat, (0, 2, 1))     # [B, 4, N_pad]

    # kernel 2: fused focal + SmoothL1 reduction
    fsum, bsum, pcnt = compute_loss_sums(cls_t, reg_t, ann_assigned, tile_n)
    cls_loss = jnp.where(pcnt > 0.0, fsum / pcnt, 0.0) * CLS_LOSS_WEIGHT
    reg_loss = jnp.where(pcnt > 0.0, bsum / pcnt, 0.0) * BOX_LOSS_WEIGHT
    return {"cls_loss": cls_loss, "reg_loss": reg_loss}


# ----------------------------- pure numpy reference (mirrors the torch code) -----------------------------
def reference_retina_loss(cls_preds, reg_preds, annotations, anchors):
    cls_preds = [np.asarray(p, np.float32) for p in cls_preds]
    reg_preds = [np.asarray(p, np.float32) for p in reg_preds]
    annotations = np.asarray(annotations, np.float32)
    anchors = np.asarray(anchors, np.float32)
    bsz, n, c = annotations.shape[0], anchors.shape[0], cls_preds[0].shape[-1]

    ann_out = np.full((bsz, n, 5), -1.0, dtype=np.float32)
    for b in range(bsz):
        gts = annotations[b]
        gts = gts[gts[:, 4] >= 0]
        if gts.shape[0] == 0:
            continue
        gb = gts[:, :4]
        ix1 = np.maximum(anchors[:, None, 0], gb[None, :, 0])
        iy1 = np.maximum(anchors[:, None, 1], gb[None, :, 1])
        ix2 = np.minimum(anchors[:, None, 2], gb[None, :, 2])
        iy2 = np.minimum(anchors[:, None, 3], gb[None, :, 3])
        inter = np.clip(ix2 - ix1, 0, None) * np.clip(iy2 - iy1, 0, None)
        aarea = np.clip(anchors[:, 2] - anchors[:, 0], 0, None) * np.clip(anchors[:, 3] - anchors[:, 1], 0, None)
        garea = np.clip(gb[:, 2] - gb[:, 0], 0, None) * np.clip(gb[:, 3] - gb[:, 1], 0, None)
        ious = inter / np.clip(aarea[:, None] + garea[None, :] - inter, 0.0001, None)
        overlap = ious.max(axis=1)
        idx = ious.argmax(axis=1)
        cls = np.full(n, -1.0, np.float32)
        cls[overlap < 0.4] = 0.0
        hit = overlap >= 0.5
        cls[hit] = gts[idx[hit], 4] + 1
        gt_boxes = gb[idx]
        aw = anchors[:, 2] - anchors[:, 0]
        ah = anchors[:, 3] - anchors[:, 1]
        acx = anchors[:, 0] + 0.5 * aw
        acy = anchors[:, 1] + 0.5 * ah
        gw = np.clip(gt_boxes[:, 2] - gt_boxes[:, 0], 0.0001, None)
        gh = np.clip(gt_boxes[:, 3] - gt_boxes[:, 1], 0.0001, None)
        gcx = gt_boxes[:, 0] + 0.5 * gw
        gcy = gt_boxes[:, 1] + 0.5 * gh
        ann_out[b, :, 0] = (gcx - acx) / aw
        ann_out[b, :, 1] = (gcy - acy) / ah
        ann_out[b, :, 2] = np.log(gw / aw)
        ann_out[b, :, 3] = np.log(gh / ah)
        ann_out[b, :, 4] = cls

    cls_flat = np.concatenate([p.reshape(bsz, -1, c) for p in cls_preds], axis=1).reshape(-1, c)
    reg_flat = np.concatenate([p.reshape(bsz, -1, 4) for p in reg_preds], axis=1).reshape(-1, 4)
    cls_flat = np.clip(cls_flat, 0.0001, 1.0 - 0.0001)
    ann_flat = ann_out.reshape(-1, 5)
    valid = ann_flat[:, 4] >= 0
    pos = ann_flat[:, 4] > 0
    npos = int(pos.sum())
    if npos == 0:
        return 0.0, 0.0
    cp = cls_flat[valid]
    ac = ann_flat[valid, 4].astype(np.int64)
    gt = np.eye(c + 1, dtype=np.float32)[ac][:, 1:]
    af = np.where(gt == 1.0, ALPHA, 1.0 - ALPHA)
    pt = np.where(gt == 1.0, cp, 1.0 - cp)
    bce = -(gt * np.log(cp) + (1.0 - gt) * np.log(1.0 - cp))
    cls_loss = float((af * (1.0 - pt) ** GAMMA * bce).sum() / npos) * CLS_LOSS_WEIGHT
    x = np.abs(reg_flat[pos] - ann_flat[pos, :4])
    sl1 = np.where(x >= BETA, x - 0.5 * BETA, 0.5 * x * x / BETA)
    reg_loss = float(sl1.sum() / npos) * BOX_LOSS_WEIGHT
    return cls_loss, reg_loss


# ----------------------------- main -----------------------------
if __name__ == "__main__":
    key = jax.random.PRNGKey(0)
    batch_size = 2
    num_classes = 20
    num_anchors_per_cell = 9
    fm_sizes = [8, 4, 2, 1, 1]   # square FPN levels for a nominal 64x64 input

    keys = jax.random.split(key, 2 * len(fm_sizes))
    cls_preds, reg_preds = [], []
    for i, s in enumerate(fm_sizes):
        cls_preds.append(jax.nn.sigmoid(
            jax.random.normal(keys[2 * i], (batch_size, s, s, num_anchors_per_cell, num_classes),
                              jnp.float32)))
        reg_preds.append(
            0.1 * jax.random.normal(keys[2 * i + 1], (batch_size, s, s, num_anchors_per_cell, 4),
                                    jnp.float32))

    # annotations: [B, M, 5] with [x1, y1, x2, y2, class]; class = -1 marks padded rows
    annotations = np.full((batch_size, 8, 5), -1.0, dtype=np.float32)
    annotations[0, 0] = [4.0, 6.0, 30.0, 40.0, 2.0]
    annotations[0, 1] = [10.0, 12.0, 50.0, 60.0, 7.0]
    annotations[0, 2] = [33.0, 5.0, 63.0, 25.0, 0.0]
    annotations[1, 0] = [2.0, 2.0, 20.0, 22.0, 5.0]
    annotations[1, 1] = [25.0, 30.0, 60.0, 62.0, 11.0]
    annotations = jnp.asarray(annotations)

    loss_dict = retina_loss(cls_preds, reg_preds, annotations)
    cls_loss = float(jax.block_until_ready(loss_dict["cls_loss"]))
    reg_loss = float(jax.block_until_ready(loss_dict["reg_loss"]))

    feature_sizes = [[int(p.shape[2]), int(p.shape[1])] for p in cls_preds]
    ref_anchors = build_one_image_anchors(feature_sizes)
    ref_cls, ref_reg = reference_retina_loss(cls_preds, reg_preds, annotations, ref_anchors)

    np.testing.assert_allclose(cls_loss, ref_cls, rtol=1e-3, atol=1e-5)
    np.testing.assert_allclose(reg_loss, ref_reg, rtol=1e-3, atol=1e-5)
    print("KERNEL_OK")
</pallas_src>

<mosaic_0001>
module attributes {stable_mosaic.version = 11 : i64} {
  func.func @_assign_kernel(%arg0: i32, %arg1: i32, %arg2: memref<1x4x896xf32, #tpu.memory_space<vmem>>, %arg3: memref<1x8x5xf32, #tpu.memory_space<vmem>>, %arg4: memref<1x5x896xf32, #tpu.memory_space<vmem>>, %arg5: memref<8x896xf32, #tpu.memory_space<vmem>>) attributes {dimension_semantics = [#tpu.dimension_semantics<parallel>, #tpu.dimension_semantics<arbitrary>], iteration_bounds = array<i64: 1, 2>, scalar_prefetch = 0 : i64, scratch_operands = 1 : i64, tpu.core_type = #tpu.core_type<tc>, window_params = [{transform_indices = @transform_0, window_bounds = array<i64: 1, 4, 896>}, {transform_indices = @transform_1, window_bounds = array<i64: 1, 8, 5>}, {transform_indices = @transform_2, window_bounds = array<i64: 1, 5, 896>}]} {
    %c0 = arith.constant 0 : index
    %c0_0 = arith.constant 0 : index
    %c0_1 = arith.constant 0 : index
    %0 = vector.load %arg2[%c0, %c0_0, %c0_1] : memref<1x4x896xf32, #tpu.memory_space<vmem>>, vector<1x4x896xf32>
    %1 = vector.shape_cast %0 : vector<1x4x896xf32> to vector<4x896xf32>
    %2 = vector.extract_strided_slice %1 {offsets = [0, 0], sizes = [1, 896], strides = [1, 1]} : vector<4x896xf32> to vector<1x896xf32>
    %3 = vector.extract_strided_slice %1 {offsets = [1, 0], sizes = [1, 896], strides = [1, 1]} : vector<4x896xf32> to vector<1x896xf32>
    %4 = vector.extract_strided_slice %1 {offsets = [2, 0], sizes = [1, 896], strides = [1, 1]} : vector<4x896xf32> to vector<1x896xf32>
    %5 = vector.extract_strided_slice %1 {offsets = [3, 0], sizes = [1, 896], strides = [1, 1]} : vector<4x896xf32> to vector<1x896xf32>
    %c0_i32 = arith.constant 0 : i32
    %6 = arith.cmpi eq, %arg1, %c0_i32 : i32
    %7 = arith.extui %6 : i1 to i32
    %c0_i32_2 = arith.constant 0 : i32
    %8 = arith.cmpi ne, %7, %c0_i32_2 : i32
    scf.if %8 {
      %165 = arith.subf %4, %2 : vector<1x896xf32>
      %166 = arith.subf %5, %3 : vector<1x896xf32>
      %cst_48 = arith.constant 0.000000e+00 : f32
      %167 = vector.broadcast %cst_48 : f32 to vector<1x896xf32>
      %168 = arith.maximumf %165, %167 : vector<1x896xf32>
      %cst_49 = arith.constant 0.000000e+00 : f32
      %169 = vector.broadcast %cst_49 : f32 to vector<1x896xf32>
      %170 = arith.maximumf %166, %169 : vector<1x896xf32>
      %171 = arith.mulf %168, %170 : vector<1x896xf32>
      %cst_50 = arith.constant 5.000000e-01 : f32
      %172 = vector.broadcast %cst_50 : f32 to vector<1x896xf32>
      %173 = arith.mulf %172, %165 : vector<1x896xf32>
      %174 = arith.addf %2, %173 : vector<1x896xf32>
      %cst_51 = arith.constant 5.000000e-01 : f32
      %175 = vector.broadcast %cst_51 : f32 to vector<1x896xf32>
      %176 = arith.mulf %175, %166 : vector<1x896xf32>
      %177 = arith.addf %3, %176 : vector<1x896xf32>
      %cst_52 = arith.constant 1.000000e+00 : f32
      %178 = vector.broadcast %cst_52 : f32 to vector<1x896xf32>
      %179 = arith.divf %178, %165 : vector<1x896xf32>
      %cst_53 = arith.constant 1.000000e+00 : f32
      %180 = vector.broadcast %cst_53 : f32 to vector<1x896xf32>
      %181 = arith.divf %180, %166 : vector<1x896xf32>
      %cst_54 = arith.constant 0.000000e+00 : f32
      %182 = vector.broadcast %cst_54 : f32 to vector<3x896xf32>
      %183 = tpu.concatenate %171, %174, %177, %179, %181, %182 in 0 : vector<1x896xf32>, vector<1x896xf32>, vector<1x896xf32>, vector<1x896xf32>, vector<1x896xf32>, vector<3x896xf32> -> vector<8x896xf32>
      %c0_55 = arith.constant 0 : index
      %c0_56 = arith.constant 0 : index
      %184 = vector.load %arg5[%c0_55, %c0_56] : memref<8x896xf32, #tpu.memory_space<vmem>>, vector<8x896xf32>
      tpu.vector_store %arg5[%c0_55, %c0_56], %183 {strides = array<i32>} : memref<8x896xf32, #tpu.memory_space<vmem>>, vector<8x896xf32>,
    } else {
    }
    %c0_3 = arith.constant 0 : index
    %c0_4 = arith.constant 0 : index
    %9 = vector.load %arg5[%c0_3, %c0_4] : memref<8x896xf32, #tpu.memory_space<vmem>>, vector<1x896xf32>
    %cst = arith.constant -2.000000e+00 : f32
    %10 = vector.broadcast %cst : f32 to vector<1x896xf32>
    %cst_5 = arith.constant 0.000000e+00 : f32
    %11 = vector.broadcast %cst_5 : f32 to vector<7x896xf32>
    %12 = tpu.concatenate %10, %11 in 0 : vector<1x896xf32>, vector<7x896xf32> -> vector<8x896xf32>
    %c0_6 = arith.constant 0 : index
    %c0_7 = arith.constant 0 : index
    %c0_8 = arith.constant 0 : index
    %13 = vector.load %arg3[%c0_6, %c0_7, %c0_8] : memref<1x8x5xf32, #tpu.memory_space<vmem>>, vector<1x8x5xf32>
    %14 = vector.shape_cast %13 : vector<1x8x5xf32> to vector<8x5xf32>
    %15 = vector.extract_strided_slice %14 {offsets = [0, 0], sizes = [8, 1], strides = [1, 1]} : vector<8x5xf32> to vector<8x1xf32>
    %16 = vector.extract_strided_slice %14 {offsets = [0, 1], sizes = [8, 1], strides = [1, 1]} : vector<8x5xf32> to vector<8x1xf32>
    %17 = vector.extract_strided_slice %14 {offsets = [0, 2], sizes = [8, 1], strides = [1, 1]} : vector<8x5xf32> to vector<8x1xf32>
    %18 = vector.extract_strided_slice %14 {offsets = [0, 3], sizes = [8, 1], strides = [1, 1]} : vector<8x5xf32> to vector<8x1xf32>
    %19 = vector.extract_strided_slice %14 {offsets = [0, 4], sizes = [8, 1], strides = [1, 1]} : vector<8x5xf32> to vector<8x1xf32>
    %cst_9 = arith.constant 0.000000e+00 : f32
    %20 = vector.broadcast %cst_9 : f32 to vector<8x1xf32>
    %21 = arith.cmpf oge, %19, %20 : vector<8x1xf32>
    %22 = vector.broadcast %2 : vector<1x896xf32> to vector<8x896xf32>
    %23 = vector.broadcast %15 : vector<8x1xf32> to vector<8x896xf32>
    %24 = arith.maximumf %22, %23 : vector<8x896xf32>
    %25 = vector.broadcast %3 : vector<1x896xf32> to vector<8x896xf32>
    %26 = vector.broadcast %16 : vector<8x1xf32> to vector<8x896xf32>
    %27 = arith.maximumf %25, %26 : vector<8x896xf32>
    %28 = vector.broadcast %4 : vector<1x896xf32> to vector<8x896xf32>
    %29 = vector.broadcast %17 : vector<8x1xf32> to vector<8x896xf32>
    %30 = arith.minimumf %28, %29 : vector<8x896xf32>
    %31 = vector.broadcast %5 : vector<1x896xf32> to vector<8x896xf32>
    %32 = vector.broadcast %18 : vector<8x1xf32> to vector<8x896xf32>
    %33 = arith.minimumf %31, %32 : vector<8x896xf32>
    %34 = arith.subf %30, %24 : vector<8x896xf32>
    %cst_10 = arith.constant 0.000000e+00 : f32
    %35 = vector.broadcast %cst_10 : f32 to vector<8x896xf32>
    %36 = arith.maximumf %34, %35 : vector<8x896xf32>
    %37 = arith.subf %33, %27 : vector<8x896xf32>
    %cst_11 = arith.constant 0.000000e+00 : f32
    %38 = vector.broadcast %cst_11 : f32 to vector<8x896xf32>
    %39 = arith.maximumf %37, %38 : vector<8x896xf32>
    %40 = arith.mulf %36, %39 : vector<8x896xf32>
    %41 = arith.subf %17, %15 : vector<8x1xf32>
    %cst_12 = arith.constant 0.000000e+00 : f32
    %42 = vector.broadcast %cst_12 : f32 to vector<8x1xf32>
    %43 = arith.maximumf %41, %42 : vector<8x1xf32>
    %44 = arith.subf %18, %16 : vector<8x1xf32>
    %cst_13 = arith.constant 0.000000e+00 : f32
    %45 = vector.broadcast %cst_13 : f32 to vector<8x1xf32>
    %46 = arith.maximumf %44, %45 : vector<8x1xf32>
    %47 = arith.mulf %43, %46 : vector<8x1xf32>
    %48 = vector.broadcast %9 : vector<1x896xf32> to vector<8x896xf32>
    %49 = vector.broadcast %47 : vector<8x1xf32> to vector<8x896xf32>
    %50 = arith.addf %48, %49 : vector<8x896xf32>
    %51 = arith.subf %50, %40 : vector<8x896xf32>
    %cst_14 = arith.constant 9.99999974E-5 : f32
    %52 = vector.broadcast %cst_14 : f32 to vector<8x896xf32>
    %53 = arith.maximumf %51, %52 : vector<8x896xf32>
    %54 = arith.divf %40, %53 : vector<8x896xf32>
    %cst_15 = arith.constant -2.000000e+00 : f32
    %55 = vector.shape_cast %21 : vector<8x1xi1> to vector<8x1xi1>
    %56 = vector.broadcast %55 : vector<8x1xi1> to vector<8x896xi1>
    %57 = vector.broadcast %cst_15 : f32 to vector<8x896xf32>
    %58 = arith.select %56, %54, %57 : vector<8x896xi1>, vector<8x896xf32>
    %cst_16 = arith.constant dense<0xFF800000> : vector<896xf32>
    %59 = vector.multi_reduction <maximumf>, %58, %cst_16 [0] : vector<8x896xf32> to vector<896xf32>
    %60 = vector.shape_cast %59 : vector<896xf32> to vector<1x896xf32>
    %61 = tpu.iota {dimensions = array<i32: 0>} : vector<8x896xi32>
    %62 = vector.broadcast %60 : vector<1x896xf32> to vector<8x896xf32>
    %63 = arith.cmpf oeq, %58, %62 : vector<8x896xf32>
    %c8_i32 = arith.constant 8 : i32
    %64 = vector.broadcast %c8_i32 : i32 to vector<8x896xi32>
    %65 = arith.select %63, %61, %64 : vector<8x896xi1>, vector<8x896xi32>
    %cst_17 = arith.constant dense<2147483647> : vector<896xi32>
    %66 = vector.multi_reduction <minsi>, %65, %cst_17 [0] : vector<8x896xi32> to vector<896xi32>
    %67 = vector.shape_cast %66 : vector<896xi32> to vector<1x896xi32>
    %68 = vector.broadcast %67 : vector<1x896xi32> to vector<8x896xi32>
    %69 = arith.cmpi eq, %61, %68 : vector<8x896xi32>
    %cst_18 = arith.constant 0.000000e+00 : f32
    %70 = vector.shape_cast %15 : vector<8x1xf32> to vector<8x1xf32>
    %71 = vector.broadcast %70 : vector<8x1xf32> to vector<8x896xf32>
    %72 = vector.broadcast %cst_18 : f32 to vector<8x896xf32>
    %73 = arith.select %69, %71, %72 : vector<8x896xi1>, vector<8x896xf32>
    %cst_19 = arith.constant dense<0.000000e+00> : vector<896xf32>
    %74 = vector.multi_reduction <add>, %73, %cst_19 [0] : vector<8x896xf32> to vector<896xf32>
    %75 = vector.shape_cast %74 : vector<896xf32> to vector<1x896xf32>
    %cst_20 = arith.constant 0.000000e+00 : f32
    %76 = vector.shape_cast %16 : vector<8x1xf32> to vector<8x1xf32>
    %77 = vector.broadcast %76 : vector<8x1xf32> to vector<8x896xf32>
    %78 = vector.broadcast %cst_20 : f32 to vector<8x896xf32>
    %79 = arith.select %69, %77, %78 : vector<8x896xi1>, vector<8x896xf32>
    %cst_21 = arith.constant dense<0.000000e+00> : vector<896xf32>
    %80 = vector.multi_reduction <add>, %79, %cst_21 [0] : vector<8x896xf32> to vector<896xf32>
    %81 = vector.shape_cast %80 : vector<896xf32> to vector<1x896xf32>
    %cst_22 = arith.constant 0.000000e+00 : f32
    %82 = vector.shape_cast %17 : vector<8x1xf32> to vector<8x1xf32>
    %83 = vector.broadcast %82 : vector<8x1xf32> to vector<8x896xf32>
    %84 = vector.broadcast %cst_22 : f32 to vector<8x896xf32>
    %85 = arith.select %69, %83, %84 : vector<8x896xi1>, vector<8x896xf32>
    %cst_23 = arith.constant dense<0.000000e+00> : vector<896xf32>
    %86 = vector.multi_reduction <add>, %85, %cst_23 [0] : vector<8x896xf32> to vector<896xf32>
    %87 = vector.shape_cast %86 : vector<896xf32> to vector<1x896xf32>
    %cst_24 = arith.constant 0.000000e+00 : f32
    %88 = vector.shape_cast %18 : vector<8x1xf32> to vector<8x1xf32>
    %89 = vector.broadcast %88 : vector<8x1xf32> to vector<8x896xf32>
    %90 = vector.broadcast %cst_24 : f32 to vector<8x896xf32>
    %91 = arith.select %69, %89, %90 : vector<8x896xi1>, vector<8x896xf32>
    %cst_25 = arith.constant dense<0.000000e+00> : vector<896xf32>
    %92 = vector.multi_reduction <add>, %91, %cst_25 [0] : vector<8x896xf32> to vector<896xf32>
    %93 = vector.shape_cast %92 : vector<896xf32> to vector<1x896xf32>
    %cst_26 = arith.constant 0.000000e+00 : f32
    %94 = vector.shape_cast %19 : vector<8x1xf32> to vector<8x1xf32>
    %95 = vector.broadcast %94 : vector<8x1xf32> to vector<8x896xf32>
    %96 = vector.broadcast %cst_26 : f32 to vector<8x896xf32>
    %97 = arith.select %69, %95, %96 : vector<8x896xi1>, vector<8x896xf32>
    %cst_27 = arith.constant dense<0.000000e+00> : vector<896xf32>
    %98 = vector.multi_reduction <add>, %97, %cst_27 [0] : vector<8x896xf32> to vector<896xf32>
    %99 = vector.shape_cast %98 : vector<896xf32> to vector<1x896xf32>
    %cst_28 = arith.constant 0.000000e+00 : f32
    %100 = vector.broadcast %cst_28 : f32 to vector<2x896xf32>
    %101 = tpu.concatenate %60, %75, %81, %87, %93, %99, %100 in 0 : vector<1x896xf32>, vector<1x896xf32>, vector<1x896xf32>, vector<1x896xf32>, vector<1x896xf32>, vector<1x896xf32>, vector<2x896xf32> -> vector<8x896xf32>
    %102 = vector.extract_strided_slice %12 {offsets = [0, 0], sizes = [1, 896], strides = [1, 1]} : vector<8x896xf32> to vector<1x896xf32>
    %103 = arith.cmpf ogt, %60, %102 : vector<1x896xf32>
    %104 = vector.shape_cast %103 : vector<1x896xi1> to vector<1x896xi1>
    %105 = vector.broadcast %104 : vector<1x896xi1> to vector<8x896xi1>
    %106 = arith.select %105, %101, %12 : vector<8x896xi1>, vector<8x896xf32>
    %107 = vector.extract_strided_slice %106 {offsets = [0, 0], sizes = [1, 896], strides = [1, 1]} : vector<8x896xf32> to vector<1x896xf32>
    %108 = vector.extract_strided_slice %106 {offsets = [1, 0], sizes = [1, 896], strides = [1, 1]} : vector<8x896xf32> to vector<1x896xf32>
    %109 = vector.extract_strided_slice %106 {offsets = [2, 0], sizes = [1, 896], strides = [1, 1]} : vector<8x896xf32> to vector<1x896xf32>
    %110 = vector.extract_strided_slice %106 {offsets = [3, 0], sizes = [1, 896], strides = [1, 1]} : vector<8x896xf32> to vector<1x896xf32>
    %111 = vector.extract_strided_slice %106 {offsets = [4, 0], sizes = [1, 896], strides = [1, 1]} : vector<8x896xf32> to vector<1x896xf32>
    %112 = vector.extract_strided_slice %106 {offsets = [5, 0], sizes = [1, 896], strides = [1, 1]} : vector<8x896xf32> to vector<1x896xf32>
    %cst_29 = arith.constant 5.000000e-01 : f32
    %113 = vector.broadcast %cst_29 : f32 to vector<1x896xf32>
    %114 = arith.cmpf oge, %107, %113 : vector<1x896xf32>
    %cst_30 = arith.constant 1.000000e+00 : f32
    %115 = vector.broadcast %cst_30 : f32 to vector<1x896xf32>
    %116 = arith.addf %112, %115 : vector<1x896xf32>
    %cst_31 = arith.constant 4.000000e-01 : f32
    %117 = vector.broadcast %cst_31 : f32 to vector<1x896xf32>
    %118 = arith.cmpf olt, %107, %117 : vector<1x896xf32>
    %cst_32 = arith.constant 0.000000e+00 : f32
    %cst_33 = arith.constant -1.000000e+00 : f32
    %119 = vector.broadcast %cst_32 : f32 to vector<1x896xf32>
    %120 = vector.broadcast %cst_33 : f32 to vector<1x896xf32>
    %121 = arith.select %118, %119, %120 : vector<1x896xi1>, vector<1x896xf32>
    %122 = arith.select %114, %116, %121 : vector<1x896xi1>, vector<1x896xf32>
    %c1 = arith.constant 1 : index
    %c0_34 = arith.constant 0 : index
    %123 = vector.load %arg5[%c1, %c0_34] : memref<8x896xf32, #tpu.memory_space<vmem>>, vector<1x896xf32>
    %c2 = arith.constant 2 : index
    %c0_35 = arith.constant 0 : index
    %124 = vector.load %arg5[%c2, %c0_35] : memref<8x896xf32, #tpu.memory_space<vmem>>, vector<1x896xf32>
    %c3 = arith.constant 3 : index
    %c0_36 = arith.constant 0 : index
    %125 = vector.load %arg5[%c3, %c0_36] : memref<8x896xf32, #tpu.memory_space<vmem>>, vector<1x896xf32>
    %c4 = arith.constant 4 : index
    %c0_37 = arith.constant 0 : index
    %126 = vector.load %arg5[%c4, %c0_37] : memref<8x896xf32, #tpu.memory_space<vmem>>, vector<1x896xf32>
    %127 = arith.subf %110, %108 : vector<1x896xf32>
    %cst_38 = arith.constant 9.99999974E-5 : f32
    %128 = vector.broadcast %cst_38 : f32 to vector<1x896xf32>
    %129 = arith.maximumf %127, %128 : vector<1x896xf32>
    %130 = arith.subf %111, %109 : vector<1x896xf32>
    %cst_39 = arith.constant 9.99999974E-5 : f32
    %131 = vector.broadcast %cst_39 : f32 to vector<1x896xf32>
    %132 = arith.maximumf %130, %131 : vector<1x896xf32>
    %cst_40 = arith.constant 5.000000e-01 : f32
    %133 = vector.broadcast %cst_40 : f32 to vector<1x896xf32>
    %134 = arith.mulf %133, %129 : vector<1x896xf32>
    %135 = arith.addf %108, %134 : vector<1x896xf32>
    %cst_41 = arith.constant 5.000000e-01 : f32
    %136 = vector.broadcast %cst_41 : f32 to vector<1x896xf32>
    %137 = arith.mulf %136, %132 : vector<1x896xf32>
    %138 = arith.addf %109, %137 : vector<1x896xf32>
    %139 = arith.subf %135, %123 : vector<1x896xf32>
    %140 = arith.mulf %139, %125 : vector<1x896xf32>
    %141 = arith.subf %138, %124 : vector<1x896xf32>
    %142 = arith.mulf %141, %126 : vector<1x896xf32>
    %143 = arith.mulf %129, %125 : vector<1x896xf32>
    %144 = math.log %143 : vector<1x896xf32>
    %145 = arith.mulf %132, %126 : vector<1x896xf32>
    %146 = math.log %145 : vector<1x896xf32>
    %147 = tpu.iota {dimensions = array<i32: 1>} : vector<1x896xi32>
    %c896_i32 = arith.constant 896 : i32
    %148 = arith.muli %arg0, %c896_i32 : i32
    %149 = vector.broadcast %148 : i32 to vector<1x896xi32>
    %150 = arith.addi %149, %147 : vector<1x896xi32>
    %c774_i32 = arith.constant 774 : i32
    %151 = vector.broadcast %c774_i32 : i32 to vector<1x896xi32>
    %152 = arith.cmpi slt, %150, %151 : vector<1x896xi32>
    %cst_42 = arith.constant -1.000000e+00 : f32
    %153 = vector.broadcast %cst_42 : f32 to vector<1x896xf32>
    %154 = arith.select %152, %122, %153 : vector<1x896xi1>, vector<1x896xf32>
    %155 = tpu.concatenate %140, %142, %144, %146, %154 in 0 : vector<1x896xf32>, vector<1x896xf32>, vector<1x896xf32>, vector<1x896xf32>, vector<1x896xf32> -> vector<5x896xf32>
    %cst_43 = arith.constant 0.000000e+00 : f32
    %156 = vector.broadcast %cst_43 : f32 to vector<1x896xf32>
    %157 = arith.cmpf oge, %107, %156 : vector<1x896xf32>
    %cst_44 = arith.constant -1.000000e+00 : f32
    %158 = vector.shape_cast %157 : vector<1x896xi1> to vector<1x896xi1>
    %159 = vector.broadcast %158 : vector<1x896xi1> to vector<5x896xi1>
    %160 = vector.broadcast %cst_44 : f32 to vector<5x896xf32>
    %161 = arith.select %159, %155, %160 : vector<5x896xi1>, vector<5x896xf32>
    %c0_45 = arith.constant 0 : index
    %c0_46 = arith.constant 0 : index
    %c0_47 = arith.constant 0 : index
    %162 = vector.load %arg4[%c0_45, %c0_46, %c0_47] : memref<1x5x896xf32, #tpu.memory_space<vmem>>, vector<1x5x896xf32>
    %163 = vector.shape_cast %162 : vector<1x5x896xf32> to vector<5x896xf32>
    %164 = vector.shape_cast %161 : vector<5x896xf32> to vector<1x5x896xf32>
    tpu.vector_store %arg4[%c0_45, %c0_46, %c0_47], %164 {strides = array<i32>} : memref<1x5x896xf32, #tpu.memory_space<vmem>>, vector<1x5x896xf32>,
    return
  }
  func.func @transform_0(%arg0: i32, %arg1: i32) -> (i32, i32, i32) {
    %c0_i32 = arith.constant 0 : i32
    %c0_i32_0 = arith.constant 0 : i32
    %c0_i32_1 = arith.constant 0 : i32
    return %c0_i32, %c0_i32_0, %arg0 : i32, i32, i32
  }
  func.func @transform_1(%arg0: i32, %arg1: i32) -> (i32, i32, i32) {
    %c0_i32 = arith.constant 0 : i32
    %c0_i32_0 = arith.constant 0 : i32
    %c0_i32_1 = arith.constant 0 : i32
    return %arg1, %c0_i32, %c0_i32_0 : i32, i32, i32
  }
  func.func @transform_2(%arg0: i32, %arg1: i32) -> (i32, i32, i32) {
    %c0_i32 = arith.constant 0 : i32
    %c0_i32_0 = arith.constant 0 : i32
    return %arg1, %c0_i32, %arg0 : i32, i32, i32
  }
}

</mosaic_0001>

<llo_original>
// kernel: tpu_custom_call.1
$region0: #{tpu_custom_call.1}
  #allocation0 [shape = 'u32[]', space=smem, size = 0x4, offset = 0x4, fixed_abs, tag = 'smem constant byte address 0x4 - core index']
  #allocation1 [shape = 'u32[144,128]{1,0:T(1,128)}', space=vmem, size = 0x12000, scoped, tag = 'internal scratch']
  #allocation2 [shape = 'f32[8,896]{1,0:T(8,128)}', space=vmem, size = 0x7000, scoped, tag = 'scratch operand']
  %s0 = inlined_call_operand.hbm [shape: f32[1,4,896], index: 0, kind: input, shape index: {}]
  %s1 = inlined_call_operand.vmem [shape: f32[2,8,5], index: 1, kind: input, shape index: {}]
  %s2 = inlined_call_operand.vmem [shape: f32[2,5,896], index: 2, kind: output, shape index: {}]
  %s3 = sld [smem:[#allocation0]]
  $region49: #{tpu_custom_call.1} parent=0
    _
  %s5 = ssub.s32 1, %s3
  %s6 = scalar_select 0, %s5, %s3
  $region1: #{tpu_custom_call.1} parent=0
    #allocation3 [shape = 'u8[14336]{0}', space=vmem, size = 0x3800, scoped, tag = 'input window, operand 0, single buffered']
    #allocation4 [shape = 's32[2]{0}', space=sflag, size = 0x8, scoped, tag = 'scoped memory for tpu_custom_call.1']
    %7 = vsyncpa [#allocation4], 0
    loop: start=0, step=1, limit=4
    $region2: #{tpu_custom_call.1} parent=1 // loop_pre_header
      _
    $region3: #{tpu_custom_call.1} parent=1 // loop_header
      %s9 = sphi 0, %s13
      %p10 = scmp.ge.s32.totalorder %s9, 4
      %s16 = sphi 0, %s28
      %s17 = sphi 0, %s24
      %s18 = sphi 0, %s16
      %s19 = sphi 0, %s17
      %s20 = sphi 0, %s18
      %s21 = sphi 0, %s19
      %s31 = sphi 0, %s33
      %s34 = sphi 0, %s31
      %s35 = sphi 0, %s34
      %s51 = sphi 0, %s35
      %s57 = sphi 0, %s59
      %s60 = sphi 0, %s57
      %s61 = sphi 0, %s60
      %s77 = sphi 0, %s61
      %s85 = sphi 0, %s87
      %s88 = sphi 0, %s85
      %s89 = sphi 0, %s88
      %s105 = sphi 0, %s89
    $region4: #{tpu_custom_call.1} parent=1 // loop_header_branch
      %12 = sbr.rel (%p10) target = $region8
    $region5: #{tpu_custom_call.1} parent=1 // loop_body
      %s14 = ssub.s32 %s9, 1
      %s15 = ssub.s32 %s9, 2
      %s22 = sadd.s32 1, %s17
      %p23 = scmp.ge.s32.totalorder %s22, 2
      %s24 = scalar_select %p23, 0, %s22
      %s25 = sadd.s32 1, %s16
      %s26 = scalar_select %p23, %s25, %s16
      %p27 = scmp.ge.s32.totalorder %s26, 1
      %s28 = scalar_select %p27, 0, %s26
      %s29 = ssub.s32 %s16, %s28
      %p30 = scmp.eq.s32.totalorder %s29, 0
      %s32 = sadd.s32 %s31, 1
      %s33 = scalar_select %p30, %s31, %s32
      %p36 = pneg %p30
      %p37 = scmp.eq.s32.totalorder %s9, 1
      %p38 = por %p36, %p37
      %p39 = scmp.ne.s32.totalorder %s31, %s34
      %p40 = scmp.eq.s32.totalorder %s9, 0
      %p41 = por %p39, %p40
      %p42 = scmp.ne.s32.totalorder %s31, %s34
      %p43 = scmp.eq.s32.totalorder %s14, 1
      %p44 = por %p42, %p43
      %p45 = scmp.ne.s32.totalorder %s34, %s35
      %p46 = scmp.eq.s32.totalorder %s14, 0
      %p47 = por %p45, %p46
      %p48 = scmp.ne.s32.totalorder %s34, %s35
      %p49 = scmp.eq.s32.totalorder %s15, 1
      %p50 = por %p48, %p49
      %p52 = scmp.ne.s32.totalorder %s35, %s51
      %p53 = scmp.eq.s32.totalorder %s15, 0
      %p54 = por %p52, %p53
      %s55 = ssub.s32 %s17, %s24
      %p56 = scmp.eq.s32.totalorder %s55, 0
      %s58 = sadd.s32 %s57, 1
      %s59 = scalar_select %p56, %s57, %s58
      %p62 = pneg %p56
      %p63 = scmp.eq.s32.totalorder %s9, 1
      %p64 = por %p62, %p63
      %p65 = scmp.ne.s32.totalorder %s57, %s60
      %p66 = scmp.eq.s32.totalorder %s9, 0
      %p67 = por %p65, %p66
      %p68 = scmp.ne.s32.totalorder %s57, %s60
      %p69 = scmp.eq.s32.totalorder %s14, 1
      %p70 = por %p68, %p69
      %p71 = scmp.ne.s32.totalorder %s60, %s61
      %p72 = scmp.eq.s32.totalorder %s14, 0
      %p73 = por %p71, %p72
      %p74 = scmp.ne.s32.totalorder %s60, %s61
      %p75 = scmp.eq.s32.totalorder %s15, 1
      %p76 = por %p74, %p75
      %p78 = scmp.ne.s32.totalorder %s61, %s77
      %p79 = scmp.eq.s32.totalorder %s15, 0
      %p80 = por %p78, %p79
      %s81 = ssub.s32 %s17, %s24
      %s82 = ssub.s32 %s16, %s28
      %s83 = sor.u32 %s81, %s82
      %p84 = scmp.eq.s32.totalorder %s83, 0
      %s86 = sadd.s32 %s85, 1
      %s87 = scalar_select %p84, %s85, %s86
      %p90 = pneg %p84
      %p91 = scmp.eq.s32.totalorder %s9, 1
      %p92 = por %p90, %p91
      %p93 = scmp.ne.s32.totalorder %s85, %s88
      %p94 = scmp.eq.s32.totalorder %s9, 0
      %p95 = por %p93, %p94
      %p96 = scmp.ne.s32.totalorder %s85, %s88
      %p97 = scmp.eq.s32.totalorder %s14, 1
      %p98 = por %p96, %p97
      %p99 = scmp.ne.s32.totalorder %s88, %s89
      %p100 = scmp.eq.s32.totalorder %s14, 0
      %p101 = por %p99, %p100
      %p102 = scmp.ne.s32.totalorder %s88, %s89
      %p103 = scmp.eq.s32.totalorder %s15, 1
      %p104 = por %p102, %p103
      %p106 = scmp.ne.s32.totalorder %s89, %s105
      %p107 = scmp.eq.s32.totalorder %s15, 0
      %p108 = por %p106, %p107
      %p109 = scmp.le.s32.totalorder 1, %s9
      %p110 = scmp.lt.s32.totalorder %s9, 3
      %p111 = pnand %p109, %p110
      %p112 = pneg %p111
      // Predicated region
      $region9: #{tpu_custom_call.1} parent=5 // pred_check
        _
      $region10: #{tpu_custom_call.1} parent=5 // pred_check_branch
        %114 = sbr.rel (%p111) target = $region12
      $region11: #{tpu_custom_call.1} parent=5 // pred_region
        %s115 = ssub.s32 %s9, 1
        // Predicated region
        $region13: #{tpu_custom_call.1} parent=11 // pred_check
          %p116 = pneg %p47
        $region14: #{tpu_custom_call.1} parent=11 // pred_check_branch
          %118 = sbr.rel (%p116) target = $region16
        $region15: #{tpu_custom_call.1} parent=11 // pred_region
          %s119 = smul.u32 7, %s18
          %s121 = ssub.s32 448, 448
          %122 = vsyncadd [#allocation4], %s121
          %s123 = smul.addr %s119, 64
          %s124 = scalar_lea.hbm %s0, %s123
          %s126 = sshll.u32 [#allocation3], 4
          %s127 = int_to_ptr.vmem [resolvable:$true] %s126
          %129 = dma.hbm_to_vmem [thread:$0]  %s124, 448, %s127, [#allocation4]
        $region16: #{tpu_custom_call.1} parent=11 // pred_fallthru
          _
      $region12: #{tpu_custom_call.1} parent=5 // pred_fallthru
        _
      %p130 = scmp.lt.s32.totalorder %s9, 2
      // Predicated region
      $region17: #{tpu_custom_call.1} parent=5 // pred_check
        %p131 = pneg %p130
      $region18: #{tpu_custom_call.1} parent=5 // pred_check_branch
        %133 = sbr.rel (%p131) target = $region20
      $region19: #{tpu_custom_call.1} parent=5 // pred_region
        // Predicated region
        $region21: #{tpu_custom_call.1} parent=19 // pred_check
          %p134 = pneg %p67
        $region22: #{tpu_custom_call.1} parent=19 // pred_check_branch
          %136 = sbr.rel (%p134) target = $region24
        $region23: #{tpu_custom_call.1} parent=19 // pred_region
          %p137 = scmp.lt.s32.totalorder %s17, 1
          %s138 = scalar_select %p137, %s17, 1
          %s139 = smul.addr %s138, 8
          %s140 = scalar_lea.vmem %s1, %s139
        $region24: #{tpu_custom_call.1} parent=19 // pred_fallthru
          _
      $region20: #{tpu_custom_call.1} parent=5 // pred_fallthru
        _
      %p141 = scmp.le.s32.totalorder 1, %s9
      %p142 = scmp.lt.s32.totalorder %s9, 3
      %p143 = pnand %p141, %p142
      %p144 = pneg %p143
      // Predicated region
      $region25: #{tpu_custom_call.1} parent=5 // pred_check
        _
      $region26: #{tpu_custom_call.1} parent=5 // pred_check_branch
        %146 = sbr.rel (%p143) target = $region28
      $region27: #{tpu_custom_call.1} parent=5 // pred_region
        %s147 = ssub.s32 %s9, 1
        // Predicated region
        $region29: #{tpu_custom_call.1} parent=27 // pred_check
          %p148 = pneg %p47
        $region30: #{tpu_custom_call.1} parent=27 // pred_check_branch
          %150 = sbr.rel (%p148) target = $region32
        $region31: #{tpu_custom_call.1} parent=27 // pred_region
          %151 = dma.done [#allocation4], 448
        $region32: #{tpu_custom_call.1} parent=27 // pred_fallthru
          _
        %p152 = pneg %p47
        %p153 = pneg %p44
        %p154 = scmp.lt.s32.totalorder %s19, 1
        %s155 = scalar_select %p154, %s19, 1
        %s156 = smul.addr %s155, 8
        %s157 = scalar_lea.vmem %s1, %s156
        %p158 = pneg %p73
        %p159 = pneg %p70
        %p160 = pneg %p101
        %p161 = pneg %p98
        %s162 = smul.u32 7, %s18
        %p163 = scmp.lt.s32.totalorder %s19, 1
        %s164 = scalar_select %p163, %s19, 1
        %p165 = scmp.lt.s32.totalorder %s162, 6
        %s166 = scalar_select %p165, %s162, 6
        %s167 = smul.addr %s164, 7
        %s168 = sadd.s32 %s166, %s167
        %s169 = smul.addr %s168, 8
        %s170 = scalar_lea.vmem %s2, %s169
        %s171 = smul.u32 7, %s18
        %p172 = scmp.lt.s32.totalorder %s19, 1
        %s173 = scalar_select %p172, %s19, 1
        %s174 = smul.addr %s173, 8
        %s175 = scalar_lea.vmem %s1, %s174
        %s176 = smul.u32 7, %s18
        %p177 = scmp.lt.s32.totalorder %s19, 1
        %s178 = scalar_select %p177, %s19, 1
        %p179 = scmp.lt.s32.totalorder %s176, 6
        %s180 = scalar_select %p179, %s176, 6
        %s181 = smul.addr %s178, 7
        %s182 = sadd.s32 %s180, %s181
        %s183 = smul.addr %s182, 8
        %s184 = scalar_lea.vmem %s2, %s183
        %s185 = smul.u32 7, %s18
        %v186 = vld [vmem:[#allocation3] sm:$0xff]
        %v187 = vld [vmem:[#allocation3 + $0x8] sm:$0xff]
        %v188 = vld [vmem:[#allocation3 + $0x10] sm:$0xff]
        %v189 = vld [vmem:[#allocation3 + $0x18] sm:$0xf]
        %p190 = scmp.eq.s32.totalorder %s19, 0
        // Predicated region
        $region33: #{tpu_custom_call.1} parent=27 // pred_check
          %p191 = pneg %p190
        $region34: #{tpu_custom_call.1} parent=27 // pred_check_branch
          %193 = sbr.rel (%p191) target = $region36
        $region35: #{tpu_custom_call.1} parent=27 // pred_region
          %v198 = vrot.slane %v186, 6
          %v199 = vrot.slane %v187, 6
          %v200 = vrot.slane %v188, 6
          %v201 = vrot.slane %v189, 6
          %v206 = vsub.f32 %v186, %v198
          %v207 = vsub.f32 %v187, %v199
          %v208 = vsub.f32 %v188, %v200
          %v209 = vsub.f32 %v189, %v201
          %v210 = vmax.f32 %v206, 0.0
          %v211 = vmax.f32 %v207, 0.0
          %v212 = vmax.f32 %v208, 0.0
          %v213 = vmax.f32 %v209, 0.0
          %v218 = vrot.slane %v210, 5
          %v219 = vrot.slane %v218, 4
          %v220 = vrot.slane %v211, 5
          %v221 = vrot.slane %v220, 4
          %v222 = vrot.slane %v212, 5
          %v223 = vrot.slane %v222, 4
          %v224 = vrot.slane %v213, 5
          %v225 = vrot.slane %v224, 4
          %v230 = vmul.f32 %v210, %v219
          %v231 = vmul.f32 %v211, %v221
          %v232 = vmul.f32 %v212, %v223
          %v233 = vmul.f32 %v213, %v225
          %v234 = vmul.f32 %v206, 0.5
          %v235 = vmul.f32 %v207, 0.5
          %v236 = vmul.f32 %v208, 0.5
          %v237 = vmul.f32 %v209, 0.5
          %v242 = vrot.slane %v234, 6
          %v243 = vrot.slane %v242, 4
          %v244 = vrot.slane %v235, 6
          %v245 = vrot.slane %v244, 4
          %v246 = vrot.slane %v236, 6
          %v247 = vrot.slane %v246, 4
          %v248 = vrot.slane %v237, 6
          %v249 = vrot.slane %v248, 4
          %v254 = vadd.f32 %v186, %v243
          %v255 = vadd.f32 %v187, %v245
          %v256 = vadd.f32 %v188, %v247
          %v257 = vadd.f32 %v189, %v249
          %v258 = vrcp.pop %v206
          %v259 = vmul.f32 1.0, %v258
          %v260 = vrcp.pop %v207
          %v261 = vmul.f32 1.0, %v260
          %v262 = vrcp.pop %v208
          %v263 = vmul.f32 1.0, %v262
          %v264 = vrcp.pop %v209
          %v265 = vmul.f32 1.0, %v264
          %v270 = vlaneseq
          %v271 = vshrl.u32 %v270, 7
          %v272 = vsub.s32 2, %v271
          %v273 = vrot.slane %v230, %v272
          %v274 = vlaneseq
          %v275 = vshrl.u32 %v274, 7
          %v276 = vsub.s32 6, %v275
          %v277 = vrot.slane %v230, %v276
          %v278 = vlaneseq
          %v279 = vshrl.u32 %v278, 7
          %v280 = vsub.s32 2, %v279
          %v281 = vrot.slane %v231, %v280
          %v282 = vlaneseq
          %v283 = vshrl.u32 %v282, 7
          %v284 = vsub.s32 6, %v283
          %v285 = vrot.slane %v231, %v284
          %v286 = vlaneseq
          %v287 = vshrl.u32 %v286, 7
          %v288 = vsub.s32 2, %v287
          %v289 = vrot.slane %v232, %v288
          %v290 = vlaneseq
          %v291 = vshrl.u32 %v290, 7
          %v292 = vsub.s32 6, %v291
          %v293 = vrot.slane %v232, %v292
          %v294 = vlaneseq
          %v295 = vshrl.u32 %v294, 7
          %v296 = vsub.s32 2, %v295
          %v297 = vrot.slane %v233, %v296
          %v309 = vlaneseq
          %v310 = vshrl.u32 %v309, 7
          %v311 = vsub.s32 0, %v310
          %v312 = vrot.slane %v254, %v311
          %v313 = vlaneseq
          %v314 = vshrl.u32 %v313, 7
          %v315 = vsub.s32 4, %v314
          %v316 = vrot.slane %v254, %v315
          %v317 = vlaneseq
          %v318 = vshrl.u32 %v317, 7
          %v319 = vsub.s32 0, %v318
          %v320 = vrot.slane %v255, %v319
          %v321 = vlaneseq
          %v322 = vshrl.u32 %v321, 7
          %v323 = vsub.s32 4, %v322
          %v324 = vrot.slane %v255, %v323
          %v325 = vlaneseq
          %v326 = vshrl.u32 %v325, 7
          %v327 = vsub.s32 0, %v326
          %v328 = vrot.slane %v256, %v327
          %v329 = vlaneseq
          %v330 = vshrl.u32 %v329, 7
          %v331 = vsub.s32 4, %v330
          %v332 = vrot.slane %v256, %v331
          %v333 = vlaneseq
          %v334 = vshrl.u32 %v333, 7
          %v335 = vsub.s32 0, %v334
          %v336 = vrot.slane %v257, %v335
          %v344 = vlaneseq
          %v345 = vshrl.u32 %v344, 7
          %v346 = vsub.s32 1, %v345
          %v347 = vrot.slane %v254, %v346
          %v348 = vlaneseq
          %v349 = vshrl.u32 %v348, 7
          %v350 = vsub.s32 5, %v349
          %v351 = vrot.slane %v254, %v350
          %v352 = vlaneseq
          %v353 = vshrl.u32 %v352, 7
          %v354 = vsub.s32 1, %v353
          %v355 = vrot.slane %v255, %v354
          %v356 = vlaneseq
          %v357 = vshrl.u32 %v356, 7
          %v358 = vsub.s32 5, %v357
          %v359 = vrot.slane %v255, %v358
          %v360 = vlaneseq
          %v361 = vshrl.u32 %v360, 7
          %v362 = vsub.s32 1, %v361
          %v363 = vrot.slane %v256, %v362
          %v364 = vlaneseq
          %v365 = vshrl.u32 %v364, 7
          %v366 = vsub.s32 5, %v365
          %v367 = vrot.slane %v256, %v366
          %v368 = vlaneseq
          %v369 = vshrl.u32 %v368, 7
          %v370 = vsub.s32 1, %v369
          %v371 = vrot.slane %v257, %v370
          %v383 = vlaneseq
          %v384 = vshrl.u32 %v383, 7
          %v385 = vsub.s32 2, %v384
          %v386 = vrot.slane %v259, %v385
          %v387 = vlaneseq
          %v388 = vshrl.u32 %v387, 7
          %v389 = vsub.s32 6, %v388
          %v390 = vrot.slane %v259, %v389
          %v391 = vlaneseq
          %v392 = vshrl.u32 %v391, 7
          %v393 = vsub.s32 2, %v392
          %v394 = vrot.slane %v261, %v393
          %v395 = vlaneseq
          %v396 = vshrl.u32 %v395, 7
          %v397 = vsub.s32 6, %v396
          %v398 = vrot.slane %v261, %v397
          %v399 = vlaneseq
          %v400 = vshrl.u32 %v399, 7
          %v401 = vsub.s32 2, %v400
          %v402 = vrot.slane %v263, %v401
          %v403 = vlaneseq
          %v404 = vshrl.u32 %v403, 7
          %v405 = vsub.s32 6, %v404
          %v406 = vrot.slane %v263, %v405
          %v407 = vlaneseq
          %v408 = vshrl.u32 %v407, 7
          %v409 = vsub.s32 2, %v408
          %v410 = vrot.slane %v265, %v409
          %v418 = vlaneseq
          %v419 = vshrl.u32 %v418, 7
          %v420 = vsub.s32 3, %v419
          %v421 = vrot.slane %v259, %v420
          %v422 = vlaneseq
          %v423 = vshrl.u32 %v422, 7
          %v424 = vsub.s32 7, %v423
          %v425 = vrot.slane %v259, %v424
          %v426 = vlaneseq
          %v427 = vshrl.u32 %v426, 7
          %v428 = vsub.s32 3, %v427
          %v429 = vrot.slane %v261, %v428
          %v430 = vlaneseq
          %v431 = vshrl.u32 %v430, 7
          %v432 = vsub.s32 7, %v431
          %v433 = vrot.slane %v261, %v432
          %v434 = vlaneseq
          %v435 = vshrl.u32 %v434, 7
          %v436 = vsub.s32 3, %v435
          %v437 = vrot.slane %v263, %v436
          %v438 = vlaneseq
          %v439 = vshrl.u32 %v438, 7
          %v440 = vsub.s32 7, %v439
          %v441 = vrot.slane %v263, %v440
          %v442 = vlaneseq
          %v443 = vshrl.u32 %v442, 7
          %v444 = vsub.s32 3, %v443
          %v445 = vrot.slane %v265, %v444
          %vm453 = vcmask 1040384
          %v454 = vsel %vm453, %v273, %v312
          %v455 = vsel %vm453, %v277, %v316
          %v456 = vsel %vm453, %v281, %v320
          %v457 = vsel %vm453, %v285, %v324
          %v458 = vsel %vm453, %v289, %v328
          %v459 = vsel %vm453, %v293, %v332
          %v460 = vsel %vm453, %v297, %v336
          %vm461 = vcmask 1041408
          %v462 = vsel %vm461, %v454, %v347
          %v463 = vsel %vm461, %v455, %v351
          %v464 = vsel %vm461, %v456, %v355
          %v465 = vsel %vm461, %v457, %v359
          %v466 = vsel %vm461, %v458, %v363
          %v467 = vsel %vm461, %v459, %v367
          %v468 = vsel %vm461, %v460, %v371
          %vm469 = vcmask 1042432
          %v470 = vsel %vm469, %v462, %v386
          %v471 = vsel %vm469, %v463, %v390
          %v472 = vsel %vm469, %v464, %v394
          %v473 = vsel %vm469, %v465, %v398
          %v474 = vsel %vm469, %v466, %v402
          %v475 = vsel %vm469, %v467, %v406
          %v476 = vsel %vm469, %v468, %v410
          %vm477 = vcmask 1043456
          %v478 = vsel %vm477, %v470, %v421
          %v479 = vsel %vm477, %v471, %v425
          %v480 = vsel %vm477, %v472, %v429
          %v481 = vsel %vm477, %v473, %v433
          %v482 = vsel %vm477, %v474, %v437
          %v483 = vsel %vm477, %v475, %v441
          %v484 = vsel %vm477, %v476, %v445
          %vm485 = vcmask 1044480
          %v486 = vsel %vm485, %v478, 0.0
          %v487 = vsel %vm485, %v479, 0.0
          %v488 = vsel %vm485, %v480, 0.0
          %v489 = vsel %vm485, %v481, 0.0
          %v490 = vsel %vm485, %v482, 0.0
          %v491 = vsel %vm485, %v483, 0.0
          %v492 = vsel %vm485, %v484, 0.0
          %493 = vst [vmem:[#allocation2] sm:$0xff] %v486
          %494 = vst [vmem:[#allocation2 + $0x8] sm:$0xff] %v487
          %495 = vst [vmem:[#allocation2 + $0x10] sm:$0xff] %v488
          %496 = vst [vmem:[#allocation2 + $0x18] sm:$0xff] %v489
          %497 = vst [vmem:[#allocation2 + $0x20] sm:$0xff] %v490
          %498 = vst [vmem:[#allocation2 + $0x28] sm:$0xff] %v491
          %499 = vst [vmem:[#allocation2 + $0x30] sm:$0xff] %v492
        $region36: #{tpu_custom_call.1} parent=27 // pred_fallthru
          _
        %v500 = vld [vmem:[#allocation2] ss:$8 sm:$0xf]
        %v501 = vld [vmem:[#allocation2] ss:$8 sm:$0xf0]
        %v502 = vor.u32 %v500, %v501
        %vm503 = vcmask 1040384
        %v504 = vsel %vm503, -2.0, 0.0
        %v505 = vld [vmem:[%s175] sm:$0xff]
        %vm506 = vcmp.ge.f32.partialorder %v505, 0.0
        %v511 = vlaneseq
        %v512 = vshrl.u32 %v511, 7
        %v513 = vsub.s32 0, %v512
        %v514 = vrot.slane %v186, %v513
        %v515 = vlaneseq
        %v516 = vshrl.u32 %v515, 7
        %v517 = vsub.s32 4, %v516
        %v518 = vrot.slane %v186, %v517
        %v519 = vlaneseq
        %v520 = vshrl.u32 %v519, 7
        %v521 = vsub.s32 0, %v520
        %v522 = vrot.slane %v187, %v521
        %v523 = vlaneseq
        %v524 = vshrl.u32 %v523, 7
        %v525 = vsub.s32 4, %v524
        %v526 = vrot.slane %v187, %v525
        %v527 = vlaneseq
        %v528 = vshrl.u32 %v527, 7
        %v529 = vsub.s32 0, %v528
        %v530 = vrot.slane %v188, %v529
        %v531 = vlaneseq
        %v532 = vshrl.u32 %v531, 7
        %v533 = vsub.s32 4, %v532
        %v534 = vrot.slane %v188, %v533
        %v535 = vlaneseq
        %v536 = vshrl.u32 %v535, 7
        %v537 = vsub.s32 0, %v536
        %v538 = vrot.slane %v189, %v537
        %v546 = vlaneseq
        %v547 = vshrl.u32 %v546, 7
        %v548 = vsub.s32 0, %v547
        %v549 = vrot.slane %v514, %v548
        %v550 = vlaneseq
        %v551 = vshrl.u32 %v550, 7
        %v552 = vsub.s32 0, %v551
        %v553 = vrot.slane %v518, %v552
        %v554 = vlaneseq
        %v555 = vshrl.u32 %v554, 7
        %v556 = vsub.s32 0, %v555
        %v557 = vrot.slane %v522, %v556
        %v558 = vlaneseq
        %v559 = vshrl.u32 %v558, 7
        %v560 = vsub.s32 0, %v559
        %v561 = vrot.slane %v526, %v560
        %v562 = vlaneseq
        %v563 = vshrl.u32 %v562, 7
        %v564 = vsub.s32 0, %v563
        %v565 = vrot.slane %v530, %v564
        %v566 = vlaneseq
        %v567 = vshrl.u32 %v566, 7
        %v568 = vsub.s32 0, %v567
        %v569 = vrot.slane %v534, %v568
        %v570 = vlaneseq
        %v571 = vshrl.u32 %v570, 7
        %v572 = vsub.s32 0, %v571
        %v573 = vrot.slane %v538, %v572
        %575 = vset.pattern.permute.xlu0 0
        %576 = vperm.xlu0 %575, %v505
        %v577 = vpop.permute.xlu0 %576
        %v579 = vmax.f32 %v549, %v577
        %v580 = vmax.f32 %v553, %v577
        %v581 = vmax.f32 %v557, %v577
        %v582 = vmax.f32 %v561, %v577
        %v583 = vmax.f32 %v565, %v577
        %v584 = vmax.f32 %v569, %v577
        %v585 = vmax.f32 %v573, %v577
        %v586 = vlaneseq
        %v587 = vshrl.u32 %v586, 7
        %v588 = vsub.s32 1, %v587
        %v589 = vrot.slane %v186, %v588
        %v590 = vlaneseq
        %v591 = vshrl.u32 %v590, 7
        %v592 = vsub.s32 5, %v591
        %v593 = vrot.slane %v186, %v592
        %v594 = vlaneseq
        %v595 = vshrl.u32 %v594, 7
        %v596 = vsub.s32 1, %v595
        %v597 = vrot.slane %v187, %v596
        %v598 = vlaneseq
        %v599 = vshrl.u32 %v598, 7
        %v600 = vsub.s32 5, %v599
        %v601 = vrot.slane %v187, %v600
        %v602 = vlaneseq
        %v603 = vshrl.u32 %v602, 7
        %v604 = vsub.s32 1, %v603
        %v605 = vrot.slane %v188, %v604
        %v606 = vlaneseq
        %v607 = vshrl.u32 %v606, 7
        %v608 = vsub.s32 5, %v607
        %v609 = vrot.slane %v188, %v608
        %v610 = vlaneseq
        %v611 = vshrl.u32 %v610, 7
        %v612 = vsub.s32 1, %v611
        %v613 = vrot.slane %v189, %v612
        %v621 = vlaneseq
        %v622 = vshrl.u32 %v621, 7
        %v623 = vsub.s32 1, %v622
        %v624 = vrot.slane %v589, %v623
        %v625 = vlaneseq
        %v626 = vshrl.u32 %v625, 7
        %v627 = vsub.s32 1, %v626
        %v628 = vrot.slane %v593, %v627
        %v629 = vlaneseq
        %v630 = vshrl.u32 %v629, 7
        %v631 = vsub.s32 1, %v630
        %v632 = vrot.slane %v597, %v631
        %v633 = vlaneseq
        %v634 = vshrl.u32 %v633, 7
        %v635 = vsub.s32 1, %v634
        %v636 = vrot.slane %v601, %v635
        %v637 = vlaneseq
        %v638 = vshrl.u32 %v637, 7
        %v639 = vsub.s32 1, %v638
        %v640 = vrot.slane %v605, %v639
        %v641 = vlaneseq
        %v642 = vshrl.u32 %v641, 7
        %v643 = vsub.s32 1, %v642
        %v644 = vrot.slane %v609, %v643
        %v645 = vlaneseq
        %v646 = vshrl.u32 %v645, 7
        %v647 = vsub.s32 1, %v646
        %v648 = vrot.slane %v613, %v647
        %649 = vset.pattern.permute.xlu0 1
        %650 = vperm.xlu0 %649, %v505
        %v651 = vpop.permute.xlu0 %650
        %v653 = vmax.f32 %v624, %v651
        %v654 = vmax.f32 %v628, %v651
        %v655 = vmax.f32 %v632, %v651
        %v656 = vmax.f32 %v636, %v651
        %v657 = vmax.f32 %v640, %v651
        %v658 = vmax.f32 %v644, %v651
        %v659 = vmax.f32 %v648, %v651
        %v660 = vlaneseq
        %v661 = vshrl.u32 %v660, 7
        %v662 = vsub.s32 2, %v661
        %v663 = vrot.slane %v186, %v662
        %v664 = vlaneseq
        %v665 = vshrl.u32 %v664, 7
        %v666 = vsub.s32 6, %v665
        %v667 = vrot.slane %v186, %v666
        %v668 = vlaneseq
        %v669 = vshrl.u32 %v668, 7
        %v670 = vsub.s32 2, %v669
        %v671 = vrot.slane %v187, %v670
        %v672 = vlaneseq
        %v673 = vshrl.u32 %v672, 7
        %v674 = vsub.s32 6, %v673
        %v675 = vrot.slane %v187, %v674
        %v676 = vlaneseq
        %v677 = vshrl.u32 %v676, 7
        %v678 = vsub.s32 2, %v677
        %v679 = vrot.slane %v188, %v678
        %v680 = vlaneseq
        %v681 = vshrl.u32 %v680, 7
        %v682 = vsub.s32 6, %v681
        %v683 = vrot.slane %v188, %v682
        %v684 = vlaneseq
        %v685 = vshrl.u32 %v684, 7
        %v686 = vsub.s32 2, %v685
        %v687 = vrot.slane %v189, %v686
        %v695 = vlaneseq
        %v696 = vshrl.u32 %v695, 7
        %v697 = vsub.s32 2, %v696
        %v698 = vrot.slane %v663, %v697
        %v699 = vlaneseq
        %v700 = vshrl.u32 %v699, 7
        %v701 = vsub.s32 2, %v700
        %v702 = vrot.slane %v667, %v701
        %v703 = vlaneseq
        %v704 = vshrl.u32 %v703, 7
        %v705 = vsub.s32 2, %v704
        %v706 = vrot.slane %v671, %v705
        %v707 = vlaneseq
        %v708 = vshrl.u32 %v707, 7
        %v709 = vsub.s32 2, %v708
        %v710 = vrot.slane %v675, %v709
        %v711 = vlaneseq
        %v712 = vshrl.u32 %v711, 7
        %v713 = vsub.s32 2, %v712
        %v714 = vrot.slane %v679, %v713
        %v715 = vlaneseq
        %v716 = vshrl.u32 %v715, 7
        %v717 = vsub.s32 2, %v716
        %v718 = vrot.slane %v683, %v717
        %v719 = vlaneseq
        %v720 = vshrl.u32 %v719, 7
        %v721 = vsub.s32 2, %v720
        %v722 = vrot.slane %v687, %v721
        %723 = vset.pattern.permute.xlu0 2
        %724 = vperm.xlu0 %723, %v505
        %v725 = vpop.permute.xlu0 %724
        %v727 = vmin.f32 %v698, %v725
        %v728 = vmin.f32 %v702, %v725
        %v729 = vmin.f32 %v706, %v725
        %v730 = vmin.f32 %v710, %v725
        %v731 = vmin.f32 %v714, %v725
        %v732 = vmin.f32 %v718, %v725
        %v733 = vmin.f32 %v722, %v725
        %v734 = vlaneseq
        %v735 = vshrl.u32 %v734, 7
        %v736 = vsub.s32 3, %v735
        %v737 = vrot.slane %v186, %v736
        %v738 = vlaneseq
        %v739 = vshrl.u32 %v738, 7
        %v740 = vsub.s32 7, %v739
        %v741 = vrot.slane %v186, %v740
        %v742 = vlaneseq
        %v743 = vshrl.u32 %v742, 7
        %v744 = vsub.s32 3, %v743
        %v745 = vrot.slane %v187, %v744
        %v746 = vlaneseq
        %v747 = vshrl.u32 %v746, 7
        %v748 = vsub.s32 7, %v747
        %v749 = vrot.slane %v187, %v748
        %v750 = vlaneseq
        %v751 = vshrl.u32 %v750, 7
        %v752 = vsub.s32 3, %v751
        %v753 = vrot.slane %v188, %v752
        %v754 = vlaneseq
        %v755 = vshrl.u32 %v754, 7
        %v756 = vsub.s32 7, %v755
        %v757 = vrot.slane %v188, %v756
        %v758 = vlaneseq
        %v759 = vshrl.u32 %v758, 7
        %v760 = vsub.s32 3, %v759
        %v761 = vrot.slane %v189, %v760
        %v769 = vlaneseq
        %v770 = vshrl.u32 %v769, 7
        %v771 = vsub.s32 3, %v770
        %v772 = vrot.slane %v737, %v771
        %v773 = vlaneseq
        %v774 = vshrl.u32 %v773, 7
        %v775 = vsub.s32 3, %v774
        %v776 = vrot.slane %v741, %v775
        %v777 = vlaneseq
        %v778 = vshrl.u32 %v777, 7
        %v779 = vsub.s32 3, %v778
        %v780 = vrot.slane %v745, %v779
        %v781 = vlaneseq
        %v782 = vshrl.u32 %v781, 7
        %v783 = vsub.s32 3, %v782
        %v784 = vrot.slane %v749, %v783
        %v785 = vlaneseq
        %v786 = vshrl.u32 %v785, 7
        %v787 = vsub.s32 3, %v786
        %v788 = vrot.slane %v753, %v787
        %v789 = vlaneseq
        %v790 = vshrl.u32 %v789, 7
        %v791 = vsub.s32 3, %v790
        %v792 = vrot.slane %v757, %v791
        %v793 = vlaneseq
        %v794 = vshrl.u32 %v793, 7
        %v795 = vsub.s32 3, %v794
        %v796 = vrot.slane %v761, %v795
        %797 = vset.pattern.permute.xlu0 3
        %798 = vperm.xlu0 %797, %v505
        %v799 = vpop.permute.xlu0 %798
        %v801 = vmin.f32 %v772, %v799
        %v802 = vmin.f32 %v776, %v799
        %v803 = vmin.f32 %v780, %v799
        %v804 = vmin.f32 %v784, %v799
        %v805 = vmin.f32 %v788, %v799
        %v806 = vmin.f32 %v792, %v799
        %v807 = vmin.f32 %v796, %v799
        %v808 = vsub.f32 %v727, %v579
        %v809 = vsub.f32 %v728, %v580
        %v810 = vsub.f32 %v729, %v581
        %v811 = vsub.f32 %v730, %v582
        %v812 = vsub.f32 %v731, %v583
        %v813 = vsub.f32 %v732, %v584
        %v814 = vsub.f32 %v733, %v585
        %v815 = vmax.f32 %v808, 0.0
        %v816 = vmax.f32 %v809, 0.0
        %v817 = vmax.f32 %v810, 0.0
        %v818 = vmax.f32 %v811, 0.0
        %v819 = vmax.f32 %v812, 0.0
        %v820 = vmax.f32 %v813, 0.0
        %v821 = vmax.f32 %v814, 0.0
        %v822 = vsub.f32 %v801, %v653
        %v823 = vsub.f32 %v802, %v654
        %v824 = vsub.f32 %v803, %v655
        %v825 = vsub.f32 %v804, %v656
        %v826 = vsub.f32 %v805, %v657
        %v827 = vsub.f32 %v806, %v658
        %v828 = vsub.f32 %v807, %v659
        %v829 = vmax.f32 %v822, 0.0
        %v830 = vmax.f32 %v823, 0.0
        %v831 = vmax.f32 %v824, 0.0
        %v832 = vmax.f32 %v825, 0.0
        %v833 = vmax.f32 %v826, 0.0
        %v834 = vmax.f32 %v827, 0.0
        %v835 = vmax.f32 %v828, 0.0
        %v836 = vmul.f32 %v815, %v829
        %v837 = vmul.f32 %v816, %v830
        %v838 = vmul.f32 %v817, %v831
        %v839 = vmul.f32 %v818, %v832
        %v840 = vmul.f32 %v819, %v833
        %v841 = vmul.f32 %v820, %v834
        %v842 = vmul.f32 %v821, %v835
        %843 = vrot.lane.b32.xlu0 %v505, 2
        %v844 = vpop.permute.xlu0 %843
        %v846 = vsub.f32 %v505, %v844
        %v847 = vmax.f32 %v846, 0.0
        %849 = vrot.lane.b32.xlu0 %v847, 127
        %v850 = vpop.permute.xlu0 %849
        %v852 = vmul.f32 %v847, %v850
        %v854 = vlaneseq
        %v855 = vshrl.u32 %v854, 7
        %v856 = vsub.s32 0, %v855
        %v857 = vrot.slane %v502, %v856
        %v858 = vlaneseq
        %v859 = vshrl.u32 %v858, 7
        %v860 = vsub.s32 1, %v859
        %v861 = vrot.slane %v502, %v860
        %v862 = vlaneseq
        %v863 = vshrl.u32 %v862, 7
        %v864 = vsub.s32 2, %v863
        %v865 = vrot.slane %v502, %v864
        %v866 = vlaneseq
        %v867 = vshrl.u32 %v866, 7
        %v868 = vsub.s32 3, %v867
        %v869 = vrot.slane %v502, %v868
        %v870 = vlaneseq
        %v871 = vshrl.u32 %v870, 7
        %v872 = vsub.s32 4, %v871
        %v873 = vrot.slane %v502, %v872
        %v874 = vlaneseq
        %v875 = vshrl.u32 %v874, 7
        %v876 = vsub.s32 5, %v875
        %v877 = vrot.slane %v502, %v876
        %v878 = vlaneseq
        %v879 = vshrl.u32 %v878, 7
        %v880 = vsub.s32 6, %v879
        %v881 = vrot.slane %v502, %v880
        %890 = vset.pattern.permute.xlu0 2
        %891 = vperm.xlu0 %890, %v852
        %v892 = vpop.permute.xlu0 %891
        %v894 = vadd.f32 %v857, %v892
        %v895 = vadd.f32 %v861, %v892
        %v896 = vadd.f32 %v865, %v892
        %v897 = vadd.f32 %v869, %v892
        %v898 = vadd.f32 %v873, %v892
        %v899 = vadd.f32 %v877, %v892
        %v900 = vadd.f32 %v881, %v892
        %v901 = vsub.f32 %v894, %v836
        %v902 = vsub.f32 %v895, %v837
        %v903 = vsub.f32 %v896, %v838
        %v904 = vsub.f32 %v897, %v839
        %v905 = vsub.f32 %v898, %v840
        %v906 = vsub.f32 %v899, %v841
        %v907 = vsub.f32 %v900, %v842
        %v908 = vmax.f32 %v901, 0.0001
        %v909 = vmax.f32 %v902, 0.0001
        %v910 = vmax.f32 %v903, 0.0001
        %v911 = vmax.f32 %v904, 0.0001
        %v912 = vmax.f32 %v905, 0.0001
        %v913 = vmax.f32 %v906, 0.0001
        %v914 = vmax.f32 %v907, 0.0001
        %v915 = vrcp.pop %v908
        %v916 = vmul.f32 %v836, %v915
        %v917 = vrcp.pop %v909
        %v918 = vmul.f32 %v837, %v917
        %v919 = vrcp.pop %v910
        %v920 = vmul.f32 %v838, %v919
        %v921 = vrcp.pop %v911
        %v922 = vmul.f32 %v839, %v921
        %v923 = vrcp.pop %v912
        %v924 = vmul.f32 %v840, %v923
        %v925 = vrcp.pop %v913
        %v926 = vmul.f32 %v841, %v925
        %v927 = vrcp.pop %v914
        %v928 = vmul.f32 %v842, %v927
        %v929 = vsel %vm506, 1, 0
        %930 = vset.pattern.permute.xlu0 4
        %931 = vperm.xlu0 %930, %v929
        %v932 = vpop.permute.xlu0 %931
        %vm933 = vcmp.eq.s32.totalorder %v932, 1
        %v934 = vsel %vm933, %v916, -2.0
        %v935 = vsel %vm933, %v918, -2.0
        %v936 = vsel %vm933, %v920, -2.0
        %v937 = vsel %vm933, %v922, -2.0
        %v938 = vsel %vm933, %v924, -2.0
        %v939 = vsel %vm933, %v926, -2.0
        %v940 = vsel %vm933, %v928, -2.0
        %v941 = vrot.slane %v934, 4
        %v942 = vmax.f32 %v934, %v941
        %v943 = vrot.slane %v942, 2
        %v944 = vmax.f32 %v942, %v943
        %v945 = vrot.slane %v944, 1
        %v946 = vmax.f32 %v944, %v945
        %v947 = vrot.slane %v935, 4
        %v948 = vmax.f32 %v935, %v947
        %v949 = vrot.slane %v948, 2
        %v950 = vmax.f32 %v948, %v949
        %v951 = vrot.slane %v950, 1
        %v952 = vmax.f32 %v950, %v951
        %v953 = vrot.slane %v936, 4
        %v954 = vmax.f32 %v936, %v953
        %v955 = vrot.slane %v954, 2
        %v956 = vmax.f32 %v954, %v955
        %v957 = vrot.slane %v956, 1
        %v958 = vmax.f32 %v956, %v957
        %v959 = vrot.slane %v937, 4
        %v960 = vmax.f32 %v937, %v959
        %v961 = vrot.slane %v960, 2
        %v962 = vmax.f32 %v960, %v961
        %v963 = vrot.slane %v962, 1
        %v964 = vmax.f32 %v962, %v963
        %v965 = vrot.slane %v938, 4
        %v966 = vmax.f32 %v938, %v965
        %v967 = vrot.slane %v966, 2
        %v968 = vmax.f32 %v966, %v967
        %v969 = vrot.slane %v968, 1
        %v970 = vmax.f32 %v968, %v969
        %v971 = vrot.slane %v939, 4
        %v972 = vmax.f32 %v939, %v971
        %v973 = vrot.slane %v972, 2
        %v974 = vmax.f32 %v972, %v973
        %v975 = vrot.slane %v974, 1
        %v976 = vmax.f32 %v974, %v975
        %v977 = vrot.slane %v940, 4
        %v978 = vmax.f32 %v940, %v977
        %v979 = vrot.slane %v978, 2
        %v980 = vmax.f32 %v978, %v979
        %v981 = vrot.slane %v980, 1
        %v982 = vmax.f32 %v980, %v981
        %v983 = vlaneseq
        %v984 = vshrl.u32 %v983, 7
        %vm985 = vcmp.eq.f32.partialorder %v934, %v946
        %vm986 = vcmp.eq.f32.partialorder %v935, %v952
        %vm987 = vcmp.eq.f32.partialorder %v936, %v958
        %vm988 = vcmp.eq.f32.partialorder %v937, %v964
        %vm989 = vcmp.eq.f32.partialorder %v938, %v970
        %vm990 = vcmp.eq.f32.partialorder %v939, %v976
        %vm991 = vcmp.eq.f32.partialorder %v940, %v982
        %v992 = vsel %vm985, %v984, 8
        %v993 = vsel %vm986, %v984, 8
        %v994 = vsel %vm987, %v984, 8
        %v995 = vsel %vm988, %v984, 8
        %v996 = vsel %vm989, %v984, 8
        %v997 = vsel %vm990, %v984, 8
        %v998 = vsel %vm991, %v984, 8
        %v999 = vrot.slane %v992, 4
        %vm1000 = vcmp.lt.s32.totalorder %v992, %v999
        %v1001 = vsel %vm1000, %v992, %v999
        %v1002 = vrot.slane %v1001, 2
        %vm1003 = vcmp.lt.s32.totalorder %v1001, %v1002
        %v1004 = vsel %vm1003, %v1001, %v1002
        %v1005 = vrot.slane %v1004, 1
        %vm1006 = vcmp.lt.s32.totalorder %v1004, %v1005
        %v1007 = vsel %vm1006, %v1004, %v1005
        %v1008 = vrot.slane %v993, 4
        %vm1009 = vcmp.lt.s32.totalorder %v993, %v1008
        %v1010 = vsel %vm1009, %v993, %v1008
        %v1011 = vrot.slane %v1010, 2
        %vm1012 = vcmp.lt.s32.totalorder %v1010, %v1011
        %v1013 = vsel %vm1012, %v1010, %v1011
        %v1014 = vrot.slane %v1013, 1
        %vm1015 = vcmp.lt.s32.totalorder %v1013, %v1014
        %v1016 = vsel %vm1015, %v1013, %v1014
        %v1017 = vrot.slane %v994, 4
        %vm1018 = vcmp.lt.s32.totalorder %v994, %v1017
        %v1019 = vsel %vm1018, %v994, %v1017
        %v1020 = vrot.slane %v1019, 2
        %vm1021 = vcmp.lt.s32.totalorder %v1019, %v1020
        %v1022 = vsel %vm1021, %v1019, %v1020
        %v1023 = vrot.slane %v1022, 1
        %vm1024 = vcmp.lt.s32.totalorder %v1022, %v1023
        %v1025 = vsel %vm1024, %v1022, %v1023
        %v1026 = vrot.slane %v995, 4
        %vm1027 = vcmp.lt.s32.totalorder %v995, %v1026
        %v1028 = vsel %vm1027, %v995, %v1026
        %v1029 = vrot.slane %v1028, 2
        %vm1030 = vcmp.lt.s32.totalorder %v1028, %v1029
        %v1031 = vsel %vm1030, %v1028, %v1029
        %v1032 = vrot.slane %v1031, 1
        %vm1033 = vcmp.lt.s32.totalorder %v1031, %v1032
        %v1034 = vsel %vm1033, %v1031, %v1032
        %v1035 = vrot.slane %v996, 4
        %vm1036 = vcmp.lt.s32.totalorder %v996, %v1035
        %v1037 = vsel %vm1036, %v996, %v1035
        %v1038 = vrot.slane %v1037, 2
        %vm1039 = vcmp.lt.s32.totalorder %v1037, %v1038
        %v1040 = vsel %vm1039, %v1037, %v1038
        %v1041 = vrot.slane %v1040, 1
        %vm1042 = vcmp.lt.s32.totalorder %v1040, %v1041
        %v1043 = vsel %vm1042, %v1040, %v1041
        %v1044 = vrot.slane %v997, 4
        %vm1045 = vcmp.lt.s32.totalorder %v997, %v1044
        %v1046 = vsel %vm1045, %v997, %v1044
        %v1047 = vrot.slane %v1046, 2
        %vm1048 = vcmp.lt.s32.totalorder %v1046, %v1047
        %v1049 = vsel %vm1048, %v1046, %v1047
        %v1050 = vrot.slane %v1049, 1
        %vm1051 = vcmp.lt.s32.totalorder %v1049, %v1050
        %v1052 = vsel %vm1051, %v1049, %v1050
        %v1053 = vrot.slane %v998, 4
        %vm1054 = vcmp.lt.s32.totalorder %v998, %v1053
        %v1055 = vsel %vm1054, %v998, %v1053
        %v1056 = vrot.slane %v1055, 2
        %vm1057 = vcmp.lt.s32.totalorder %v1055, %v1056
        %v1058 = vsel %vm1057, %v1055, %v1056
        %v1059 = vrot.slane %v1058, 1
        %vm1060 = vcmp.lt.s32.totalorder %v1058, %v1059
        %v1061 = vsel %vm1060, %v1058, %v1059
        %vm1062 = vcmp.eq.s32.totalorder %v984, %v1007
        %vm1063 = vcmp.eq.s32.totalorder %v984, %v1016
        %vm1064 = vcmp.eq.s32.totalorder %v984, %v1025
        %vm1065 = vcmp.eq.s32.totalorder %v984, %v1034
        %vm1066 = vcmp.eq.s32.totalorder %v984, %v1043
        %vm1067 = vcmp.eq.s32.totalorder %v984, %v1052
        %vm1068 = vcmp.eq.s32.totalorder %v984, %v1061
        %v1069 = vsel %vm1062, %v577, 0.0
        %v1070 = vsel %vm1063, %v577, 0.0
        %v1071 = vsel %vm1064, %v577, 0.0
        %v1072 = vsel %vm1065, %v577, 0.0
        %v1073 = vsel %vm1066, %v577, 0.0
        %v1074 = vsel %vm1067, %v577, 0.0
        %v1075 = vsel %vm1068, %v577, 0.0
        %v1076 = vrot.slane %v1069, 4
        %v1077 = vadd.f32 %v1069, %v1076
        %v1078 = vrot.slane %v1077, 2
        %v1079 = vadd.f32 %v1077, %v1078
        %v1080 = vrot.slane %v1079, 1
        %v1081 = vadd.f32 %v1079, %v1080
        %v1082 = vrot.slane %v1070, 4
        %v1083 = vadd.f32 %v1070, %v1082
        %v1084 = vrot.slane %v1083, 2
        %v1085 = vadd.f32 %v1083, %v1084
        %v1086 = vrot.slane %v1085, 1
        %v1087 = vadd.f32 %v1085, %v1086
        %v1088 = vrot.slane %v1071, 4
        %v1089 = vadd.f32 %v1071, %v1088
        %v1090 = vrot.slane %v1089, 2
        %v1091 = vadd.f32 %v1089, %v1090
        %v1092 = vrot.slane %v1091, 1
        %v1093 = vadd.f32 %v1091, %v1092
        %v1094 = vrot.slane %v1072, 4
        %v1095 = vadd.f32 %v1072, %v1094
        %v1096 = vrot.slane %v1095, 2
        %v1097 = vadd.f32 %v1095, %v1096
        %v1098 = vrot.slane %v1097, 1
        %v1099 = vadd.f32 %v1097, %v1098
        %v1100 = vrot.slane %v1073, 4
        %v1101 = vadd.f32 %v1073, %v1100
        %v1102 = vrot.slane %v1101, 2
        %v1103 = vadd.f32 %v1101, %v1102
        %v1104 = vrot.slane %v1103, 1
        %v1105 = vadd.f32 %v1103, %v1104
        %v1106 = vrot.slane %v1074, 4
        %v1107 = vadd.f32 %v1074, %v1106
        %v1108 = vrot.slane %v1107, 2
        %v1109 = vadd.f32 %v1107, %v1108
        %v1110 = vrot.slane %v1109, 1
        %v1111 = vadd.f32 %v1109, %v1110
        %v1112 = vrot.slane %v1075, 4
        %v1113 = vadd.f32 %v1075, %v1112
        %v1114 = vrot.slane %v1113, 2
        %v1115 = vadd.f32 %v1113, %v1114
        %v1116 = vrot.slane %v1115, 1
        %v1117 = vadd.f32 %v1115, %v1116
        %v1118 = vsel %vm1062, %v651, 0.0
        %v1119 = vsel %vm1063, %v651, 0.0
        %v1120 = vsel %vm1064, %v651, 0.0
        %v1121 = vsel %vm1065, %v651, 0.0
        %v1122 = vsel %vm1066, %v651, 0.0
        %v1123 = vsel %vm1067, %v651, 0.0
        %v1124 = vsel %vm1068, %v651, 0.0
        %v1125 = vrot.slane %v1118, 4
        %v1126 = vadd.f32 %v1118, %v1125
        %v1127 = vrot.slane %v1126, 2
        %v1128 = vadd.f32 %v1126, %v1127
        %v1129 = vrot.slane %v1128, 1
        %v1130 = vadd.f32 %v1128, %v1129
        %v1131 = vrot.slane %v1119, 4
        %v1132 = vadd.f32 %v1119, %v1131
        %v1133 = vrot.slane %v1132, 2
        %v1134 = vadd.f32 %v1132, %v1133
        %v1135 = vrot.slane %v1134, 1
        %v1136 = vadd.f32 %v1134, %v1135
        %v1137 = vrot.slane %v1120, 4
        %v1138 = vadd.f32 %v1120, %v1137
        %v1139 = vrot.slane %v1138, 2
        %v1140 = vadd.f32 %v1138, %v1139
        %v1141 = vrot.slane %v1140, 1
        %v1142 = vadd.f32 %v1140, %v1141
        %v1143 = vrot.slane %v1121, 4
        %v1144 = vadd.f32 %v1121, %v1143
        %v1145 = vrot.slane %v1144, 2
        %v1146 = vadd.f32 %v1144, %v1145
        %v1147 = vrot.slane %v1146, 1
        %v1148 = vadd.f32 %v1146, %v1147
        %v1149 = vrot.slane %v1122, 4
        %v1150 = vadd.f32 %v1122, %v1149
        %v1151 = vrot.slane %v1150, 2
        %v1152 = vadd.f32 %v1150, %v1151
        %v1153 = vrot.slane %v1152, 1
        %v1154 = vadd.f32 %v1152, %v1153
        %v1155 = vrot.slane %v1123, 4
        %v1156 = vadd.f32 %v1123, %v1155
        %v1157 = vrot.slane %v1156, 2
        %v1158 = vadd.f32 %v1156, %v1157
        %v1159 = vrot.slane %v1158, 1
        %v1160 = vadd.f32 %v1158, %v1159
        %v1161 = vrot.slane %v1124, 4
        %v1162 = vadd.f32 %v1124, %v1161
        %v1163 = vrot.slane %v1162, 2
        %v1164 = vadd.f32 %v1162, %v1163
        %v1165 = vrot.slane %v1164, 1
        %v1166 = vadd.f32 %v1164, %v1165
        %v1167 = vsel %vm1062, %v725, 0.0
        %v1168 = vsel %vm1063, %v725, 0.0
        %v1169 = vsel %vm1064, %v725, 0.0
        %v1170 = vsel %vm1065, %v725, 0.0
        %v1171 = vsel %vm1066, %v725, 0.0
        %v1172 = vsel %vm1067, %v725, 0.0
        %v1173 = vsel %vm1068, %v725, 0.0
        %v1174 = vrot.slane %v1167, 4
        %v1175 = vadd.f32 %v1167, %v1174
        %v1176 = vrot.slane %v1175, 2
        %v1177 = vadd.f32 %v1175, %v1176
        %v1178 = vrot.slane %v1177, 1
        %v1179 = vadd.f32 %v1177, %v1178
        %v1180 = vrot.slane %v1168, 4
        %v1181 = vadd.f32 %v1168, %v1180
        %v1182 = vrot.slane %v1181, 2
        %v1183 = vadd.f32 %v1181, %v1182
        %v1184 = vrot.slane %v1183, 1
        %v1185 = vadd.f32 %v1183, %v1184
        %v1186 = vrot.slane %v1169, 4
        %v1187 = vadd.f32 %v1169, %v1186
        %v1188 = vrot.slane %v1187, 2
        %v1189 = vadd.f32 %v1187, %v1188
        %v1190 = vrot.slane %v1189, 1
        %v1191 = vadd.f32 %v1189, %v1190
        %v1192 = vrot.slane %v1170, 4
        %v1193 = vadd.f32 %v1170, %v1192
        %v1194 = vrot.slane %v1193, 2
        %v1195 = vadd.f32 %v1193, %v1194
        %v1196 = vrot.slane %v1195, 1
        %v1197 = vadd.f32 %v1195, %v1196
        %v1198 = vrot.slane %v1171, 4
        %v1199 = vadd.f32 %v1171, %v1198
        %v1200 = vrot.slane %v1199, 2
        %v1201 = vadd.f32 %v1199, %v1200
        %v1202 = vrot.slane %v1201, 1
        %v1203 = vadd.f32 %v1201, %v1202
        %v1204 = vrot.slane %v1172, 4
        %v1205 = vadd.f32 %v1172, %v1204
        %v1206 = vrot.slane %v1205, 2
        %v1207 = vadd.f32 %v1205, %v1206
        %v1208 = vrot.slane %v1207, 1
        %v1209 = vadd.f32 %v1207, %v1208
        %v1210 = vrot.slane %v1173, 4
        %v1211 = vadd.f32 %v1173, %v1210
        %v1212 = vrot.slane %v1211, 2
        %v1213 = vadd.f32 %v1211, %v1212
        %v1214 = vrot.slane %v1213, 1
        %v1215 = vadd.f32 %v1213, %v1214
        %v1216 = vsel %vm1062, %v799, 0.0
        %v1217 = vsel %vm1063, %v799, 0.0
        %v1218 = vsel %vm1064, %v799, 0.0
        %v1219 = vsel %vm1065, %v799, 0.0
        %v1220 = vsel %vm1066, %v799, 0.0
        %v1221 = vsel %vm1067, %v799, 0.0
        %v1222 = vsel %vm1068, %v799, 0.0
        %v1223 = vrot.slane %v1216, 4
        %v1224 = vadd.f32 %v1216, %v1223
        %v1225 = vrot.slane %v1224, 2
        %v1226 = vadd.f32 %v1224, %v1225
        %v1227 = vrot.slane %v1226, 1
        %v1228 = vadd.f32 %v1226, %v1227
        %v1229 = vrot.slane %v1217, 4
        %v1230 = vadd.f32 %v1217, %v1229
        %v1231 = vrot.slane %v1230, 2
        %v1232 = vadd.f32 %v1230, %v1231
        %v1233 = vrot.slane %v1232, 1
        %v1234 = vadd.f32 %v1232, %v1233
        %v1235 = vrot.slane %v1218, 4
        %v1236 = vadd.f32 %v1218, %v1235
        %v1237 = vrot.slane %v1236, 2
        %v1238 = vadd.f32 %v1236, %v1237
        %v1239 = vrot.slane %v1238, 1
        %v1240 = vadd.f32 %v1238, %v1239
        %v1241 = vrot.slane %v1219, 4
        %v1242 = vadd.f32 %v1219, %v1241
        %v1243 = vrot.slane %v1242, 2
        %v1244 = vadd.f32 %v1242, %v1243
        %v1245 = vrot.slane %v1244, 1
        %v1246 = vadd.f32 %v1244, %v1245
        %v1247 = vrot.slane %v1220, 4
        %v1248 = vadd.f32 %v1220, %v1247
        %v1249 = vrot.slane %v1248, 2
        %v1250 = vadd.f32 %v1248, %v1249
        %v1251 = vrot.slane %v1250, 1
        %v1252 = vadd.f32 %v1250, %v1251
        %v1253 = vrot.slane %v1221, 4
        %v1254 = vadd.f32 %v1221, %v1253
        %v1255 = vrot.slane %v1254, 2
        %v1256 = vadd.f32 %v1254, %v1255
        %v1257 = vrot.slane %v1256, 1
        %v1258 = vadd.f32 %v1256, %v1257
        %v1259 = vrot.slane %v1222, 4
        %v1260 = vadd.f32 %v1222, %v1259
        %v1261 = vrot.slane %v1260, 2
        %v1262 = vadd.f32 %v1260, %v1261
        %v1263 = vrot.slane %v1262, 1
        %v1264 = vadd.f32 %v1262, %v1263
        %1265 = vset.pattern.permute.xlu0 4
        %1266 = vperm.xlu0 %1265, %v505
        %v1267 = vpop.permute.xlu0 %1266
        %v1269 = vsel %vm1062, %v1267, 0.0
        %v1270 = vsel %vm1063, %v1267, 0.0
        %v1271 = vsel %vm1064, %v1267, 0.0
        %v1272 = vsel %vm1065, %v1267, 0.0
        %v1273 = vsel %vm1066, %v1267, 0.0
        %v1274 = vsel %vm1067, %v1267, 0.0
        %v1275 = vsel %vm1068, %v1267, 0.0
        %v1276 = vrot.slane %v1269, 4
        %v1277 = vadd.f32 %v1269, %v1276
        %v1278 = vrot.slane %v1277, 2
        %v1279 = vadd.f32 %v1277, %v1278
        %v1280 = vrot.slane %v1279, 1
        %v1281 = vadd.f32 %v1279, %v1280
        %v1282 = vrot.slane %v1270, 4
        %v1283 = vadd.f32 %v1270, %v1282
        %v1284 = vrot.slane %v1283, 2
        %v1285 = vadd.f32 %v1283, %v1284
        %v1286 = vrot.slane %v1285, 1
        %v1287 = vadd.f32 %v1285, %v1286
        %v1288 = vrot.slane %v1271, 4
        %v1289 = vadd.f32 %v1271, %v1288
        %v1290 = vrot.slane %v1289, 2
        %v1291 = vadd.f32 %v1289, %v1290
        %v1292 = vrot.slane %v1291, 1
        %v1293 = vadd.f32 %v1291, %v1292
        %v1294 = vrot.slane %v1272, 4
        %v1295 = vadd.f32 %v1272, %v1294
        %v1296 = vrot.slane %v1295, 2
        %v1297 = vadd.f32 %v1295, %v1296
        %v1298 = vrot.slane %v1297, 1
        %v1299 = vadd.f32 %v1297, %v1298
        %v1300 = vrot.slane %v1273, 4
        %v1301 = vadd.f32 %v1273, %v1300
        %v1302 = vrot.slane %v1301, 2
        %v1303 = vadd.f32 %v1301, %v1302
        %v1304 = vrot.slane %v1303, 1
        %v1305 = vadd.f32 %v1303, %v1304
        %v1306 = vrot.slane %v1274, 4
        %v1307 = vadd.f32 %v1274, %v1306
        %v1308 = vrot.slane %v1307, 2
        %v1309 = vadd.f32 %v1307, %v1308
        %v1310 = vrot.slane %v1309, 1
        %v1311 = vadd.f32 %v1309, %v1310
        %v1312 = vrot.slane %v1275, 4
        %v1313 = vadd.f32 %v1275, %v1312
        %v1314 = vrot.slane %v1313, 2
        %v1315 = vadd.f32 %v1313, %v1314
        %v1316 = vrot.slane %v1315, 1
        %v1317 = vadd.f32 %v1315, %v1316
        %v1318 = vsel %vm503, %v946, %v1081
        %v1319 = vsel %vm503, %v952, %v1087
        %v1320 = vsel %vm503, %v958, %v1093
        %v1321 = vsel %vm503, %v964, %v1099
        %v1322 = vsel %vm503, %v970, %v1105
        %v1323 = vsel %vm503, %v976, %v1111
        %v1324 = vsel %vm503, %v982, %v1117
        %vm1325 = vcmask 1041408
        %v1326 = vsel %vm1325, %v1318, %v1130
        %v1327 = vsel %vm1325, %v1319, %v1136
        %v1328 = vsel %vm1325, %v1320, %v1142
        %v1329 = vsel %vm1325, %v1321, %v1148
        %v1330 = vsel %vm1325, %v1322, %v1154
        %v1331 = vsel %vm1325, %v1323, %v1160
        %v1332 = vsel %vm1325, %v1324, %v1166
        %vm1333 = vcmask 1042432
        %v1334 = vsel %vm1333, %v1326, %v1179
        %v1335 = vsel %vm1333, %v1327, %v1185
        %v1336 = vsel %vm1333, %v1328, %v1191
        %v1337 = vsel %vm1333, %v1329, %v1197
        %v1338 = vsel %vm1333, %v1330, %v1203
        %v1339 = vsel %vm1333, %v1331, %v1209
        %v1340 = vsel %vm1333, %v1332, %v1215
        %vm1341 = vcmask 1043456
        %v1342 = vsel %vm1341, %v1334, %v1228
        %v1343 = vsel %vm1341, %v1335, %v1234
        %v1344 = vsel %vm1341, %v1336, %v1240
        %v1345 = vsel %vm1341, %v1337, %v1246
        %v1346 = vsel %vm1341, %v1338, %v1252
        %v1347 = vsel %vm1341, %v1339, %v1258
        %v1348 = vsel %vm1341, %v1340, %v1264
        %vm1349 = vcmask 1044480
        %v1350 = vsel %vm1349, %v1342, %v1281
        %v1351 = vsel %vm1349, %v1343, %v1287
        %v1352 = vsel %vm1349, %v1344, %v1293
        %v1353 = vsel %vm1349, %v1345, %v1299
        %v1354 = vsel %vm1349, %v1346, %v1305
        %v1355 = vsel %vm1349, %v1347, %v1311
        %v1356 = vsel %vm1349, %v1348, %v1317
        %vm1357 = vcmask 1045504
        %v1358 = vsel %vm1357, %v1350, 0.0
        %v1359 = vsel %vm1357, %v1351, 0.0
        %v1360 = vsel %vm1357, %v1352, 0.0
        %v1361 = vsel %vm1357, %v1353, 0.0
        %v1362 = vsel %vm1357, %v1354, 0.0
        %v1363 = vsel %vm1357, %v1355, 0.0
        %v1364 = vsel %vm1357, %v1356, 0.0
        %vm1365 = vcmp.gt.f32.partialorder %v946, %v504
        %vm1366 = vcmp.gt.f32.partialorder %v952, %v504
        %vm1367 = vcmp.gt.f32.partialorder %v958, %v504
        %vm1368 = vcmp.gt.f32.partialorder %v964, %v504
        %vm1369 = vcmp.gt.f32.partialorder %v970, %v504
        %vm1370 = vcmp.gt.f32.partialorder %v976, %v504
        %vm1371 = vcmp.gt.f32.partialorder %v982, %v504
        %v1372 = vsel %vm1365, 1, 0
        %v1373 = vsel %vm1366, 1, 0
        %v1374 = vsel %vm1367, 1, 0
        %v1375 = vsel %vm1368, 1, 0
        %v1376 = vsel %vm1369, 1, 0
        %v1377 = vsel %vm1370, 1, 0
        %v1378 = vsel %vm1371, 1, 0
        %v1379 = vlaneseq
        %v1380 = vshrl.u32 %v1379, 7
        %v1381 = vsub.s32 0, %v1380
        %v1382 = vrot.slane %v1372, %v1381
        %v1383 = vlaneseq
        %v1384 = vshrl.u32 %v1383, 7
        %v1385 = vsub.s32 0, %v1384
        %v1386 = vrot.slane %v1373, %v1385
        %v1387 = vlaneseq
        %v1388 = vshrl.u32 %v1387, 7
        %v1389 = vsub.s32 0, %v1388
        %v1390 = vrot.slane %v1374, %v1389
        %v1391 = vlaneseq
        %v1392 = vshrl.u32 %v1391, 7
        %v1393 = vsub.s32 0, %v1392
        %v1394 = vrot.slane %v1375, %v1393
        %v1395 = vlaneseq
        %v1396 = vshrl.u32 %v1395, 7
        %v1397 = vsub.s32 0, %v1396
        %v1398 = vrot.slane %v1376, %v1397
        %v1399 = vlaneseq
        %v1400 = vshrl.u32 %v1399, 7
        %v1401 = vsub.s32 0, %v1400
        %v1402 = vrot.slane %v1377, %v1401
        %v1403 = vlaneseq
        %v1404 = vshrl.u32 %v1403, 7
        %v1405 = vsub.s32 0, %v1404
        %v1406 = vrot.slane %v1378, %v1405
        %vm1407 = vcmp.eq.s32.totalorder %v1382, 1
        %vm1408 = vcmp.eq.s32.totalorder %v1386, 1
        %vm1409 = vcmp.eq.s32.totalorder %v1390, 1
        %vm1410 = vcmp.eq.s32.totalorder %v1394, 1
        %vm1411 = vcmp.eq.s32.totalorder %v1398, 1
        %vm1412 = vcmp.eq.s32.totalorder %v1402, 1
        %vm1413 = vcmp.eq.s32.totalorder %v1406, 1
        %v1414 = vsel %vm1407, %v1358, %v504
        %v1415 = vsel %vm1408, %v1359, %v504
        %v1416 = vsel %vm1409, %v1360, %v504
        %v1417 = vsel %vm1410, %v1361, %v504
        %v1418 = vsel %vm1411, %v1362, %v504
        %v1419 = vsel %vm1412, %v1363, %v504
        %v1420 = vsel %vm1413, %v1364, %v504
        %vm1421 = vcmp.ge.f32.partialorder %v1414, 0.5
        %vm1422 = vcmp.ge.f32.partialorder %v1415, 0.5
        %vm1423 = vcmp.ge.f32.partialorder %v1416, 0.5
        %vm1424 = vcmp.ge.f32.partialorder %v1417, 0.5
        %vm1425 = vcmp.ge.f32.partialorder %v1418, 0.5
        %vm1426 = vcmp.ge.f32.partialorder %v1419, 0.5
        %vm1427 = vcmp.ge.f32.partialorder %v1420, 0.5
        %v1428 = vadd.f32 %v1414, 1.0
        %v1429 = vadd.f32 %v1415, 1.0
        %v1430 = vadd.f32 %v1416, 1.0
        %v1431 = vadd.f32 %v1417, 1.0
        %v1432 = vadd.f32 %v1418, 1.0
        %v1433 = vadd.f32 %v1419, 1.0
        %v1434 = vadd.f32 %v1420, 1.0
        %vm1435 = vcmp.lt.f32.partialorder %v1414, 0.4
        %vm1436 = vcmp.lt.f32.partialorder %v1415, 0.4
        %vm1437 = vcmp.lt.f32.partialorder %v1416, 0.4
        %vm1438 = vcmp.lt.f32.partialorder %v1417, 0.4
        %vm1439 = vcmp.lt.f32.partialorder %v1418, 0.4
        %vm1440 = vcmp.lt.f32.partialorder %v1419, 0.4
        %vm1441 = vcmp.lt.f32.partialorder %v1420, 0.4
        %v1442 = vsel %vm1435, 0.0, -1.0
        %v1443 = vsel %vm1436, 0.0, -1.0
        %v1444 = vsel %vm1437, 0.0, -1.0
        %v1445 = vsel %vm1438, 0.0, -1.0
        %v1446 = vsel %vm1439, 0.0, -1.0
        %v1447 = vsel %vm1440, 0.0, -1.0
        %v1448 = vsel %vm1441, 0.0, -1.0
        %v1456 = vrot.slane %v1428, 5
        %v1457 = vrot.slane %v1429, 5
        %v1458 = vrot.slane %v1430, 5
        %v1459 = vrot.slane %v1431, 5
        %v1460 = vrot.slane %v1432, 5
        %v1461 = vrot.slane %v1433, 5
        %v1462 = vrot.slane %v1434, 5
        %v1470 = vsel %vm1421, %v1456, %v1442
        %v1471 = vsel %vm1422, %v1457, %v1443
        %v1472 = vsel %vm1423, %v1458, %v1444
        %v1473 = vsel %vm1424, %v1459, %v1445
        %v1474 = vsel %vm1425, %v1460, %v1446
        %v1475 = vsel %vm1426, %v1461, %v1447
        %v1476 = vsel %vm1427, %v1462, %v1448
        %s1477 = scalar_lea.vmem [#allocation2], 1
        %v1478 = vld [vmem:[%s1477] ss:$8 sm:$0xf]
        %v1479 = vld [vmem:[%s1477] ss:$8 sm:$0xf0]
        %v1480 = vor.u32 %v1478, %v1479
        %s1481 = scalar_lea.vmem [#allocation2], 2
        %v1482 = vld [vmem:[%s1481] ss:$8 sm:$0xf]
        %v1483 = vld [vmem:[%s1481] ss:$8 sm:$0xf0]
        %v1484 = vor.u32 %v1482, %v1483
        %s1485 = scalar_lea.vmem [#allocation2], 3
        %v1486 = vld [vmem:[%s1485] ss:$8 sm:$0xf]
        %v1487 = vld [vmem:[%s1485] ss:$8 sm:$0xf0]
        %v1488 = vor.u32 %v1486, %v1487
        %s1489 = scalar_lea.vmem [#allocation2], 4
        %v1490 = vld [vmem:[%s1489] ss:$8 sm:$0xf]
        %v1491 = vld [vmem:[%s1489] ss:$8 sm:$0xf0]
        %v1492 = vor.u32 %v1490, %v1491
        %v1500 = vrot.slane %v1414, 6
        %v1501 = vrot.slane %v1415, 6
        %v1502 = vrot.slane %v1416, 6
        %v1503 = vrot.slane %v1417, 6
        %v1504 = vrot.slane %v1418, 6
        %v1505 = vrot.slane %v1419, 6
        %v1506 = vrot.slane %v1420, 6
        %v1514 = vsub.f32 %v1414, %v1500
        %v1515 = vsub.f32 %v1415, %v1501
        %v1516 = vsub.f32 %v1416, %v1502
        %v1517 = vsub.f32 %v1417, %v1503
        %v1518 = vsub.f32 %v1418, %v1504
        %v1519 = vsub.f32 %v1419, %v1505
        %v1520 = vsub.f32 %v1420, %v1506
        %v1521 = vmax.f32 %v1514, 0.0001
        %v1522 = vmax.f32 %v1515, 0.0001
        %v1523 = vmax.f32 %v1516, 0.0001
        %v1524 = vmax.f32 %v1517, 0.0001
        %v1525 = vmax.f32 %v1518, 0.0001
        %v1526 = vmax.f32 %v1519, 0.0001
        %v1527 = vmax.f32 %v1520, 0.0001
        %v1528 = vmul.f32 %v1521, 0.5
        %v1529 = vmul.f32 %v1522, 0.5
        %v1530 = vmul.f32 %v1523, 0.5
        %v1531 = vmul.f32 %v1524, 0.5
        %v1532 = vmul.f32 %v1525, 0.5
        %v1533 = vmul.f32 %v1526, 0.5
        %v1534 = vmul.f32 %v1527, 0.5
        %v1542 = vrot.slane %v1528, 2
        %v1543 = vrot.slane %v1529, 2
        %v1544 = vrot.slane %v1530, 2
        %v1545 = vrot.slane %v1531, 2
        %v1546 = vrot.slane %v1532, 2
        %v1547 = vrot.slane %v1533, 2
        %v1548 = vrot.slane %v1534, 2
        %v1556 = vadd.f32 %v1414, %v1542
        %v1557 = vadd.f32 %v1415, %v1543
        %v1558 = vadd.f32 %v1416, %v1544
        %v1559 = vadd.f32 %v1417, %v1545
        %v1560 = vadd.f32 %v1418, %v1546
        %v1561 = vadd.f32 %v1419, %v1547
        %v1562 = vadd.f32 %v1420, %v1548
        %v1564 = vlaneseq
        %v1565 = vshrl.u32 %v1564, 7
        %v1566 = vsub.s32 0, %v1565
        %v1567 = vrot.slane %v1480, %v1566
        %v1568 = vlaneseq
        %v1569 = vshrl.u32 %v1568, 7
        %v1570 = vsub.s32 1, %v1569
        %v1571 = vrot.slane %v1480, %v1570
        %v1572 = vlaneseq
        %v1573 = vshrl.u32 %v1572, 7
        %v1574 = vsub.s32 2, %v1573
        %v1575 = vrot.slane %v1480, %v1574
        %v1576 = vlaneseq
        %v1577 = vshrl.u32 %v1576, 7
        %v1578 = vsub.s32 3, %v1577
        %v1579 = vrot.slane %v1480, %v1578
        %v1580 = vlaneseq
        %v1581 = vshrl.u32 %v1580, 7
        %v1582 = vsub.s32 4, %v1581
        %v1583 = vrot.slane %v1480, %v1582
        %v1584 = vlaneseq
        %v1585 = vshrl.u32 %v1584, 7
        %v1586 = vsub.s32 5, %v1585
        %v1587 = vrot.slane %v1480, %v1586
        %v1588 = vlaneseq
        %v1589 = vshrl.u32 %v1588, 7
        %v1590 = vsub.s32 6, %v1589
        %v1591 = vrot.slane %v1480, %v1590
        %v1599 = vsub.f32 %v1556, %v1567
        %v1600 = vsub.f32 %v1557, %v1571
        %v1601 = vsub.f32 %v1558, %v1575
        %v1602 = vsub.f32 %v1559, %v1579
        %v1603 = vsub.f32 %v1560, %v1583
        %v1604 = vsub.f32 %v1561, %v1587
        %v1605 = vsub.f32 %v1562, %v1591
        %v1607 = vlaneseq
        %v1608 = vshrl.u32 %v1607, 7
        %v1609 = vsub.s32 0, %v1608
        %v1610 = vrot.slane %v1488, %v1609
        %v1611 = vlaneseq
        %v1612 = vshrl.u32 %v1611, 7
        %v1613 = vsub.s32 1, %v1612
        %v1614 = vrot.slane %v1488, %v1613
        %v1615 = vlaneseq
        %v1616 = vshrl.u32 %v1615, 7
        %v1617 = vsub.s32 2, %v1616
        %v1618 = vrot.slane %v1488, %v1617
        %v1619 = vlaneseq
        %v1620 = vshrl.u32 %v1619, 7
        %v1621 = vsub.s32 3, %v1620
        %v1622 = vrot.slane %v1488, %v1621
        %v1623 = vlaneseq
        %v1624 = vshrl.u32 %v1623, 7
        %v1625 = vsub.s32 4, %v1624
        %v1626 = vrot.slane %v1488, %v1625
        %v1627 = vlaneseq
        %v1628 = vshrl.u32 %v1627, 7
        %v1629 = vsub.s32 5, %v1628
        %v1630 = vrot.slane %v1488, %v1629
        %v1631 = vlaneseq
        %v1632 = vshrl.u32 %v1631, 7
        %v1633 = vsub.s32 6, %v1632
        %v1634 = vrot.slane %v1488, %v1633
        %v1642 = vmul.f32 %v1599, %v1610
        %v1643 = vmul.f32 %v1600, %v1614
        %v1644 = vmul.f32 %v1601, %v1618
        %v1645 = vmul.f32 %v1602, %v1622
        %v1646 = vmul.f32 %v1603, %v1626
        %v1647 = vmul.f32 %v1604, %v1630
        %v1648 = vmul.f32 %v1605, %v1634
        %v1650 = vlaneseq
        %v1651 = vshrl.u32 %v1650, 7
        %v1652 = vsub.s32 0, %v1651
        %v1653 = vrot.slane %v1484, %v1652
        %v1654 = vlaneseq
        %v1655 = vshrl.u32 %v1654, 7
        %v1656 = vsub.s32 1, %v1655
        %v1657 = vrot.slane %v1484, %v1656
        %v1658 = vlaneseq
        %v1659 = vshrl.u32 %v1658, 7
        %v1660 = vsub.s32 2, %v1659
        %v1661 = vrot.slane %v1484, %v1660
        %v1662 = vlaneseq
        %v1663 = vshrl.u32 %v1662, 7
        %v1664 = vsub.s32 3, %v1663
        %v1665 = vrot.slane %v1484, %v1664
        %v1666 = vlaneseq
        %v1667 = vshrl.u32 %v1666, 7
        %v1668 = vsub.s32 4, %v1667
        %v1669 = vrot.slane %v1484, %v1668
        %v1670 = vlaneseq
        %v1671 = vshrl.u32 %v1670, 7
        %v1672 = vsub.s32 5, %v1671
        %v1673 = vrot.slane %v1484, %v1672
        %v1674 = vlaneseq
        %v1675 = vshrl.u32 %v1674, 7
        %v1676 = vsub.s32 6, %v1675
        %v1677 = vrot.slane %v1484, %v1676
        %v1685 = vsub.f32 %v1556, %v1653
        %v1686 = vsub.f32 %v1557, %v1657
        %v1687 = vsub.f32 %v1558, %v1661
        %v1688 = vsub.f32 %v1559, %v1665
        %v1689 = vsub.f32 %v1560, %v1669
        %v1690 = vsub.f32 %v1561, %v1673
        %v1691 = vsub.f32 %v1562, %v1677
        %v1693 = vlaneseq
        %v1694 = vshrl.u32 %v1693, 7
        %v1695 = vsub.s32 0, %v1694
        %v1696 = vrot.slane %v1492, %v1695
        %v1697 = vlaneseq
        %v1698 = vshrl.u32 %v1697, 7
        %v1699 = vsub.s32 1, %v1698
        %v1700 = vrot.slane %v1492, %v1699
        %v1701 = vlaneseq
        %v1702 = vshrl.u32 %v1701, 7
        %v1703 = vsub.s32 2, %v1702
        %v1704 = vrot.slane %v1492, %v1703
        %v1705 = vlaneseq
        %v1706 = vshrl.u32 %v1705, 7
        %v1707 = vsub.s32 3, %v1706
        %v1708 = vrot.slane %v1492, %v1707
        %v1709 = vlaneseq
        %v1710 = vshrl.u32 %v1709, 7
        %v1711 = vsub.s32 4, %v1710
        %v1712 = vrot.slane %v1492, %v1711
        %v1713 = vlaneseq
        %v1714 = vshrl.u32 %v1713, 7
        %v1715 = vsub.s32 5, %v1714
        %v1716 = vrot.slane %v1492, %v1715
        %v1717 = vlaneseq
        %v1718 = vshrl.u32 %v1717, 7
        %v1719 = vsub.s32 6, %v1718
        %v1720 = vrot.slane %v1492, %v1719
        %v1728 = vmul.f32 %v1685, %v1696
        %v1729 = vmul.f32 %v1686, %v1700
        %v1730 = vmul.f32 %v1687, %v1704
        %v1731 = vmul.f32 %v1688, %v1708
        %v1732 = vmul.f32 %v1689, %v1712
        %v1733 = vmul.f32 %v1690, %v1716
        %v1734 = vmul.f32 %v1691, %v1720
        %v1735 = vmul.f32 %v1521, %v1610
        %v1736 = vmul.f32 %v1522, %v1614
        %v1737 = vmul.f32 %v1523, %v1618
        %v1738 = vmul.f32 %v1524, %v1622
        %v1739 = vmul.f32 %v1525, %v1626
        %v1740 = vmul.f32 %v1526, %v1630
        %v1741 = vmul.f32 %v1527, %v1634
        %v1742 = vlog2.pop %v1735
        %v1743 = vmul.f32 %v1742, 0.6931472
        %v1744 = vlog2.pop %v1736
        %v1745 = vmul.f32 %v1744, 0.6931472
        %v1746 = vlog2.pop %v1737
        %v1747 = vmul.f32 %v1746, 0.6931472
        %v1748 = vlog2.pop %v1738
        %v1749 = vmul.f32 %v1748, 0.6931472
        %v1750 = vlog2.pop %v1739
        %v1751 = vmul.f32 %v1750, 0.6931472
        %v1752 = vlog2.pop %v1740
        %v1753 = vmul.f32 %v1752, 0.6931472
        %v1754 = vlog2.pop %v1741
        %v1755 = vmul.f32 %v1754, 0.6931472
        %v1756 = vmul.f32 %v1521, %v1696
        %v1757 = vmul.f32 %v1522, %v1700
        %v1758 = vmul.f32 %v1523, %v1704
        %v1759 = vmul.f32 %v1524, %v1708
        %v1760 = vmul.f32 %v1525, %v1712
        %v1761 = vmul.f32 %v1526, %v1716
        %v1762 = vmul.f32 %v1527, %v1720
        %v1763 = vlog2.pop %v1756
        %v1764 = vmul.f32 %v1763, 0.6931472
        %v1765 = vlog2.pop %v1757
        %v1766 = vmul.f32 %v1765, 0.6931472
        %v1767 = vlog2.pop %v1758
        %v1768 = vmul.f32 %v1767, 0.6931472
        %v1769 = vlog2.pop %v1759
        %v1770 = vmul.f32 %v1769, 0.6931472
        %v1771 = vlog2.pop %v1760
        %v1772 = vmul.f32 %v1771, 0.6931472
        %v1773 = vlog2.pop %v1761
        %v1774 = vmul.f32 %v1773, 0.6931472
        %v1775 = vlog2.pop %v1762
        %v1776 = vmul.f32 %v1775, 0.6931472
        %v1777 = vlaneseq
        %v1778 = vand.u32 %v1777, 127
        %v1779 = vadd.s32 %v1778, 128
        %v1780 = vadd.s32 %v1778, 256
        %v1781 = vadd.s32 %v1778, 384
        %v1782 = vadd.s32 %v1778, 512
        %v1783 = vadd.s32 %v1778, 640
        %v1784 = vadd.s32 %v1778, 768
        %s1785 = smul.u32 %s18, 896
        %v1786 = vstv %s1785
        %v1787 = vadd.s32 %v1786, %v1778
        %v1788 = vadd.s32 %v1786, %v1779
        %v1789 = vadd.s32 %v1786, %v1780
        %v1790 = vadd.s32 %v1786, %v1781
        %v1791 = vadd.s32 %v1786, %v1782
        %v1792 = vadd.s32 %v1786, %v1783
        %v1793 = vadd.s32 %v1786, %v1784
        %vm1794 = vcmp.lt.s32.totalorder %v1787, 774
        %vm1795 = vcmp.lt.s32.totalorder %v1788, 774
        %vm1796 = vcmp.lt.s32.totalorder %v1789, 774
        %vm1797 = vcmp.lt.s32.totalorder %v1790, 774
        %vm1798 = vcmp.lt.s32.totalorder %v1791, 774
        %vm1799 = vcmp.lt.s32.totalorder %v1792, 774
        %vm1800 = vcmp.lt.s32.totalorder %v1793, 774
        %v1801 = vsel %vm1794, %v1470, -1.0
        %v1802 = vsel %vm1795, %v1471, -1.0
        %v1803 = vsel %vm1796, %v1472, -1.0
        %v1804 = vsel %vm1797, %v1473, -1.0
        %v1805 = vsel %vm1798, %v1474, -1.0
        %v1806 = vsel %vm1799, %v1475, -1.0
        %v1807 = vsel %vm1800, %v1476, -1.0
        %v1815 = vrot.slane %v1642, 1
        %v1816 = vrot.slane %v1643, 1
        %v1817 = vrot.slane %v1644, 1
        %v1818 = vrot.slane %v1645, 1
        %v1819 = vrot.slane %v1646, 1
        %v1820 = vrot.slane %v1647, 1
        %v1821 = vrot.slane %v1648, 1
        %v1836 = vrot.slane %v1728, 1
        %v1837 = vrot.slane %v1729, 1
        %v1838 = vrot.slane %v1730, 1
        %v1839 = vrot.slane %v1731, 1
        %v1840 = vrot.slane %v1732, 1
        %v1841 = vrot.slane %v1733, 1
        %v1842 = vrot.slane %v1734, 1
        %v1857 = vrot.slane %v1743, 1
        %v1858 = vrot.slane %v1745, 1
        %v1859 = vrot.slane %v1747, 1
        %v1860 = vrot.slane %v1749, 1
        %v1861 = vrot.slane %v1751, 1
        %v1862 = vrot.slane %v1753, 1
        %v1863 = vrot.slane %v1755, 1
        %v1878 = vrot.slane %v1764, 1
        %v1879 = vrot.slane %v1766, 1
        %v1880 = vrot.slane %v1768, 1
        %v1881 = vrot.slane %v1770, 1
        %v1882 = vrot.slane %v1772, 1
        %v1883 = vrot.slane %v1774, 1
        %v1884 = vrot.slane %v1776, 1
        %v1899 = vrot.slane %v1801, 4
        %v1900 = vrot.slane %v1802, 4
        %v1901 = vrot.slane %v1803, 4
        %v1902 = vrot.slane %v1804, 4
        %v1903 = vrot.slane %v1805, 4
        %v1904 = vrot.slane %v1806, 4
        %v1905 = vrot.slane %v1807, 4
        %v1913 = vsel %vm503, %v1815, %v1836
        %v1914 = vsel %vm503, %v1816, %v1837
        %v1915 = vsel %vm503, %v1817, %v1838
        %v1916 = vsel %vm503, %v1818, %v1839
        %v1917 = vsel %vm503, %v1819, %v1840
        %v1918 = vsel %vm503, %v1820, %v1841
        %v1919 = vsel %vm503, %v1821, %v1842
        %v1920 = vsel %vm1325, %v1913, %v1857
        %v1921 = vsel %vm1325, %v1914, %v1858
        %v1922 = vsel %vm1325, %v1915, %v1859
        %v1923 = vsel %vm1325, %v1916, %v1860
        %v1924 = vsel %vm1325, %v1917, %v1861
        %v1925 = vsel %vm1325, %v1918, %v1862
        %v1926 = vsel %vm1325, %v1919, %v1863
        %v1927 = vsel %vm1333, %v1920, %v1878
        %v1928 = vsel %vm1333, %v1921, %v1879
        %v1929 = vsel %vm1333, %v1922, %v1880
        %v1930 = vsel %vm1333, %v1923, %v1881
        %v1931 = vsel %vm1333, %v1924, %v1882
        %v1932 = vsel %vm1333, %v1925, %v1883
        %v1933 = vsel %vm1333, %v1926, %v1884
        %v1934 = vsel %vm1341, %v1927, %v1899
        %v1935 = vsel %vm1341, %v1928, %v1900
        %v1936 = vsel %vm1341, %v1929, %v1901
        %v1937 = vsel %vm1341, %v1930, %v1902
        %v1938 = vsel %vm1341, %v1931, %v1903
        %v1939 = vsel %vm1341, %v1932, %v1904
        %v1940 = vsel %vm1341, %v1933, %v1905
        %vm1941 = vcmp.ge.f32.partialorder %v1414, 0.0
        %vm1942 = vcmp.ge.f32.partialorder %v1415, 0.0
        %vm1943 = vcmp.ge.f32.partialorder %v1416, 0.0
        %vm1944 = vcmp.ge.f32.partialorder %v1417, 0.0
        %vm1945 = vcmp.ge.f32.partialorder %v1418, 0.0
        %vm1946 = vcmp.ge.f32.partialorder %v1419, 0.0
        %vm1947 = vcmp.ge.f32.partialorder %v1420, 0.0
        %v1948 = vsel %vm1941, 1, 0
        %v1949 = vsel %vm1942, 1, 0
        %v1950 = vsel %vm1943, 1, 0
        %v1951 = vsel %vm1944, 1, 0
        %v1952 = vsel %vm1945, 1, 0
        %v1953 = vsel %vm1946, 1, 0
        %v1954 = vsel %vm1947, 1, 0
        %v1955 = vlaneseq
        %v1956 = vshrl.u32 %v1955, 7
        %v1957 = vsub.s32 0, %v1956
        %v1958 = vrot.slane %v1948, %v1957
        %v1959 = vlaneseq
        %v1960 = vshrl.u32 %v1959, 7
        %v1961 = vsub.s32 0, %v1960
        %v1962 = vrot.slane %v1949, %v1961
        %v1963 = vlaneseq
        %v1964 = vshrl.u32 %v1963, 7
        %v1965 = vsub.s32 0, %v1964
        %v1966 = vrot.slane %v1950, %v1965
        %v1967 = vlaneseq
        %v1968 = vshrl.u32 %v1967, 7
        %v1969 = vsub.s32 0, %v1968
        %v1970 = vrot.slane %v1951, %v1969
        %v1971 = vlaneseq
        %v1972 = vshrl.u32 %v1971, 7
        %v1973 = vsub.s32 0, %v1972
        %v1974 = vrot.slane %v1952, %v1973
        %v1975 = vlaneseq
        %v1976 = vshrl.u32 %v1975, 7
        %v1977 = vsub.s32 0, %v1976
        %v1978 = vrot.slane %v1953, %v1977
        %v1979 = vlaneseq
        %v1980 = vshrl.u32 %v1979, 7
        %v1981 = vsub.s32 0, %v1980
        %v1982 = vrot.slane %v1954, %v1981
        %vm1983 = vcmp.eq.s32.totalorder %v1958, 1
        %vm1984 = vcmp.eq.s32.totalorder %v1962, 1
        %vm1985 = vcmp.eq.s32.totalorder %v1966, 1
        %vm1986 = vcmp.eq.s32.totalorder %v1970, 1
        %vm1987 = vcmp.eq.s32.totalorder %v1974, 1
        %vm1988 = vcmp.eq.s32.totalorder %v1978, 1
        %vm1989 = vcmp.eq.s32.totalorder %v1982, 1
        %v1990 = vsel %vm1983, %v1934, -1.0
        %v1991 = vsel %vm1984, %v1935, -1.0
        %v1992 = vsel %vm1985, %v1936, -1.0
        %v1993 = vsel %vm1986, %v1937, -1.0
        %v1994 = vsel %vm1987, %v1938, -1.0
        %v1995 = vsel %vm1988, %v1939, -1.0
        %v1996 = vsel %vm1989, %v1940, -1.0
        %1997 = vst [vmem:[%s184] sm:$0x1f] %v1990
        %1998 = vst [vmem:[%s184 + $0x8] sm:$0x1f] %v1991
        %1999 = vst [vmem:[%s184 + $0x10] sm:$0x1f] %v1992
        %2000 = vst [vmem:[%s184 + $0x18] sm:$0x1f] %v1993
        %2001 = vst [vmem:[%s184 + $0x20] sm:$0x1f] %v1994
        %2002 = vst [vmem:[%s184 + $0x28] sm:$0x1f] %v1995
        %2003 = vst [vmem:[%s184 + $0x30] sm:$0x1f] %v1996
        %s2004 = smul.u32 7, %s18
        %p2005 = scmp.lt.s32.totalorder %s19, 1
        %s2006 = scalar_select %p2005, %s19, 1
        %p2007 = scmp.lt.s32.totalorder %s2004, 6
        %s2008 = scalar_select %p2007, %s2004, 6
        %s2009 = smul.addr %s2006, 7
        %s2010 = sadd.s32 %s2008, %s2009
        %s2011 = smul.addr %s2010, 8
        %s2012 = scalar_lea.vmem %s2, %s2011
        // Predicated region
        $region37: #{tpu_custom_call.1} parent=27 // pred_check
          %p2013 = pneg %p98
        $region38: #{tpu_custom_call.1} parent=27 // pred_check_branch
          %2015 = sbr.rel (%p2013) target = $region40
        $region39: #{tpu_custom_call.1} parent=27 // pred_region
          %s2016 = smul.u32 7, %s18
        $region40: #{tpu_custom_call.1} parent=27 // pred_fallthru
          _
      $region28: #{tpu_custom_call.1} parent=5 // pred_fallthru
        _
      %p2017 = scmp.le.s32.totalorder 2, %s9
      // Predicated region
      $region41: #{tpu_custom_call.1} parent=5 // pred_check
        %p2018 = pneg %p2017
      $region42: #{tpu_custom_call.1} parent=5 // pred_check_branch
        %2020 = sbr.rel (%p2018) target = $region44
      $region43: #{tpu_custom_call.1} parent=5 // pred_region
        %s2021 = ssub.s32 %s9, 2
        // Predicated region
        $region45: #{tpu_custom_call.1} parent=43 // pred_check
          %p2022 = pneg %p104
        $region46: #{tpu_custom_call.1} parent=43 // pred_check_branch
          %2024 = sbr.rel (%p2022) target = $region48
        $region47: #{tpu_custom_call.1} parent=43 // pred_region
          %s2025 = smul.u32 7, %s20
          %p2026 = scmp.lt.s32.totalorder %s21, 1
          %s2027 = scalar_select %p2026, %s21, 1
          %p2028 = scmp.lt.s32.totalorder %s2025, 6
          %s2029 = scalar_select %p2028, %s2025, 6
          %s2030 = smul.addr %s2027, 7
          %s2031 = sadd.s32 %s2029, %s2030
          %s2032 = smul.addr %s2031, 8
          %s2033 = scalar_lea.vmem %s2, %s2032
        $region48: #{tpu_custom_call.1} parent=43 // pred_fallthru
          _
      $region44: #{tpu_custom_call.1} parent=5 // pred_fallthru
        _
    $region6: #{tpu_custom_call.1} parent=1 // loop_footer
      %s13 = sadd.s32 1, %s9
    $region7: #{tpu_custom_call.1} parent=1 // loop_footer_branch
      %8 = sbr.rel target = $region3
    $region8: #{tpu_custom_call.1} parent=1 // loop_exit
      _
    %2034 = vsyncpa [#allocation4], 1
    %s2035 = scalar_lea.sflag [#allocation4], 1
    %2036 = vsyncpa %s2035, 1

</llo_original>
